<compile_context>
chip_gen: v7x
topology: tpu7x:2x2x1
jax: 0.10.0
libtpu: 0.0.40
codegen_flags: <defaults>
</compile_context>

<pallas_src>
import functools

import jax
import jax.numpy as jnp
from jax import lax
from jax.experimental import pallas as pl
from jax.experimental.pallas import tpu as pltpu

_SUBLANES = 8


def _round_up(n, m):
    return ((n + m - 1) // m) * m


def _pad2d(a, rows, cols, value=0.0):
    pr = rows - a.shape[0]
    pc = cols - a.shape[1]
    if pr == 0 and pc == 0:
        return a
    return jnp.pad(a, ((0, pr), (0, pc)), constant_values=value)


def _full_spec(shape):
    nd = len(shape)
    return pl.BlockSpec(shape, lambda *_: (0,) * nd)


def _vmem_limit(operands, out_bytes, scratch_bytes=0):
    n = sum(int(a.size) * a.dtype.itemsize for a in operands)
    total = 2 * n + 2 * int(out_bytes) + int(scratch_bytes) + (4 << 20)
    return int(min(max(total, 16 << 20), 64 << 20))


# ---------------------------------------------------------------------------
# Node phase: num_layers SAGE layers (single grid step, everything in VMEM)
# ---------------------------------------------------------------------------
def _node_phase_kernel(x_ref, adj_ref, invdeg_ref, agge_ref,
                       wcx_ref, wcn_ref, wce_ref, bc_ref, o_ref,
                       *, num_layers):
    f32 = jnp.float32
    bf16 = jnp.bfloat16

    # Loop-invariant: mean-aggregated edge-feature contribution + conv bias.
    edge_term = (jnp.dot(agge_ref[...], wce_ref[...],
                         preferred_element_type=f32) + bc_ref[...])

    adj = adj_ref[...]          # [Np, Np] bf16 un-normalized counts
    inv_deg = invdeg_ref[...]   # [Np, 1]  f32
    wcx = wcx_ref[...]          # [nd, nd] bf16
    wcn = wcn_ref[...]          # [nd, nd] bf16

    x_b = x_ref[...]            # [Np, nd] bf16
    x_f = x_b.astype(f32)
    for _ in range(num_layers):       # module reuses a single conv instance
        self_t = jnp.dot(x_b, wcx, preferred_element_type=f32)
        agg = jnp.dot(adj, x_b, preferred_element_type=f32) * inv_deg
        nbr_t = jnp.dot(agg.astype(bf16), wcn, preferred_element_type=f32)
        # dropout (eval mode) is identity; the module applies ReLU per layer.
        x_f = jnp.maximum(self_t + nbr_t + edge_term, 0.0)
        x_b = x_f.astype(bf16)
    o_ref[...] = x_f            # f32 node embeddings (32-bit rows gather cleanly)


# ---------------------------------------------------------------------------
# Edge phase: per-edge gather of node embeddings + 4-layer scoring MLP
# ---------------------------------------------------------------------------
def _edge_phase_kernel(src_ref, dst_ref,                       # SMEM (prefetch)
                       xe_ref, ef_ref,
                       w1v_ref, w1u_ref, w1e_ref, b1_ref,
                       w2_ref, b2_ref, w3_ref, b3_ref, w4t_ref, b4_ref,
                       o_ref, vbuf_ref, ubuf_ref, *, tile_e):
    f32 = jnp.float32
    bf16 = jnp.bfloat16
    base = pl.program_id(0) * tile_e

    # Real gathers: edge_index lives in SMEM; copy rows of the VMEM-resident
    # embedding table with dynamic sublane slices (no O(E*N) one-hot matmuls).
    def gather(i, carry):
        v = src_ref[base + i]
        u = dst_ref[base + i]
        vbuf_ref[pl.ds(i, 1), :] = xe_ref[pl.ds(v, 1), :]
        ubuf_ref[pl.ds(i, 1), :] = xe_ref[pl.ds(u, 1), :]
        return carry

    lax.fori_loop(0, tile_e, gather, 0)

    h = (jnp.dot(vbuf_ref[...].astype(bf16), w1v_ref[...],
                 preferred_element_type=f32)
         + jnp.dot(ubuf_ref[...].astype(bf16), w1u_ref[...],
                   preferred_element_type=f32)
         + jnp.dot(ef_ref[...], w1e_ref[...], preferred_element_type=f32)
         + b1_ref[...])
    h = jnp.maximum(h, 0.0)
    h = jnp.maximum(jnp.dot(h.astype(bf16), w2_ref[...],
                            preferred_element_type=f32) + b2_ref[...], 0.0)
    h = jnp.maximum(jnp.dot(h.astype(bf16), w3_ref[...],
                            preferred_element_type=f32) + b3_ref[...], 0.0)
    # Final (64 -> 1) layer: VPU multiply + XLU lane reduction (byte-minimal).
    y = jnp.sum(h * w4t_ref[...], axis=1, keepdims=True) + b4_ref[...]
    o_ref[...] = y.astype(o_ref.dtype)


# ---------------------------------------------------------------------------
# Wrapper
# ---------------------------------------------------------------------------
def custom_graph_sage_forward(x, edge_index, edge_features, params, *,
                              num_layers, tile_e_max=512):
    f32 = jnp.float32
    bf16 = jnp.bfloat16

    num_nodes, node_dim = x.shape          # static under jit
    num_edges = edge_index.shape[1]
    edge_dim = edge_features.shape[1]

    w_conv, b_conv = params["conv"]
    (w1, b1), (w2, b2), (w3, b3), (w4, b4) = params["mlp"]

    src = edge_index[0].astype(jnp.int32)
    dst = edge_index[1].astype(jnp.int32)
    ef = edge_features.astype(f32)

    # ---- O(E) graph preprocessing (scatter-adds), no dense one-hots ----------
    adj = jnp.zeros((num_nodes, num_nodes), f32).at[dst, src].add(1.0)  # [N,N]
    deg = jnp.sum(adj, axis=1, keepdims=True)                           # [N,1]
    inv_deg = 1.0 / jnp.maximum(deg, 1.0)
    agg_edge = (jnp.zeros((num_nodes, edge_dim), f32).at[dst].add(ef)
                * inv_deg)                                              # [N,ed]

    # ---------------------------- node-phase kernel ---------------------------
    n_pad = _round_up(num_nodes, _SUBLANES)
    x_p = _pad2d(x.astype(f32), n_pad, node_dim).astype(bf16)
    adj_p = _pad2d(adj, n_pad, n_pad).astype(bf16)      # counts exact in bf16
    invdeg_p = _pad2d(inv_deg, n_pad, 1, value=1.0)     # keep normalization f32
    agge_p = _pad2d(agg_edge, n_pad, edge_dim).astype(bf16)

    # Pre-split conv weight rows (no in-kernel sublane slicing):
    #   concat([x, agg_node, agg_edge]) @ Wc == x@Wc_x + agg_node@Wc_n + agg_e@Wc_e
    wc_x = w_conv[:node_dim].astype(bf16)
    wc_n = w_conv[node_dim:2 * node_dim].astype(bf16)
    wc_e = w_conv[2 * node_dim:].astype(bf16)
    bc = b_conv.reshape(1, -1).astype(f32)

    node_ops = (x_p, adj_p, invdeg_p, agge_p, wc_x, wc_n, wc_e, bc)
    x_emb = pl.pallas_call(
        functools.partial(_node_phase_kernel, num_layers=num_layers),
        out_shape=jax.ShapeDtypeStruct((n_pad, node_dim), f32),
        grid=(1,),
        in_specs=[_full_spec(op.shape) for op in node_ops],
        out_specs=_full_spec((n_pad, node_dim)),
        compiler_params=pltpu.CompilerParams(
            dimension_semantics=("arbitrary",),
            vmem_limit_bytes=_vmem_limit(node_ops, n_pad * node_dim * 4)),
    )(*node_ops)

    # ---------------------------- edge-phase kernel ---------------------------
    tile_e = min(tile_e_max, _round_up(num_edges, _SUBLANES))
    e_pad = _round_up(num_edges, tile_e)
    num_tiles = e_pad // tile_e

    src_p = jnp.pad(src, (0, e_pad - num_edges))   # padded edges point at node 0
    dst_p = jnp.pad(dst, (0, e_pad - num_edges))
    ef_p = _pad2d(ef, e_pad, edge_dim).astype(bf16)

    w1_v = w1[:node_dim].astype(bf16)
    w1_u = w1[node_dim:2 * node_dim].astype(bf16)
    w1_e = w1[2 * node_dim:].astype(bf16)
    b1r = b1.reshape(1, -1).astype(f32)
    w2b = w2.astype(bf16)
    b2r = b2.reshape(1, -1).astype(f32)
    w3b = w3.astype(bf16)
    b3r = b3.reshape(1, -1).astype(f32)
    w4t = w4.reshape(1, -1).astype(f32)            # (1, 64) for the lane-reduce
    b4r = b4.reshape(1, -1).astype(f32)            # (1, 1)

    edge_ops = (x_emb, ef_p, w1_v, w1_u, w1_e, b1r, w2b, b2r, w3b, b3r, w4t, b4r)

    def _resident(shape):
        nd_ = len(shape)
        return pl.BlockSpec(shape, lambda t, *_: (0,) * nd_)

    in_specs = ([_resident(x_emb.shape),
                 pl.BlockSpec((tile_e, edge_dim), lambda t, *_: (t, 0))]
                + [_resident(op.shape) for op in edge_ops[2:]])

    scratch_bytes = 2 * tile_e * node_dim * 4
    grid_spec = pltpu.PrefetchScalarGridSpec(
        num_scalar_prefetch=2,
        grid=(num_tiles,),
        in_specs=in_specs,
        out_specs=pl.BlockSpec((tile_e, 1), lambda t, *_: (t, 0)),
        scratch_shapes=[pltpu.VMEM((tile_e, node_dim), f32),
                        pltpu.VMEM((tile_e, node_dim), f32)],
    )
    out = pl.pallas_call(
        functools.partial(_edge_phase_kernel, tile_e=tile_e),
        out_shape=jax.ShapeDtypeStruct((e_pad, 1), f32),
        grid_spec=grid_spec,
        compiler_params=pltpu.CompilerParams(
            dimension_semantics=("parallel",),
            vmem_limit_bytes=_vmem_limit(edge_ops, e_pad * 4, scratch_bytes)),
    )(src_p, dst_p, *edge_ops)

    # Output is already byte-minimal (E x 1 f32); just drop padded edges.
    return out[:num_edges]


# ---------------------------------------------------------------------------
# Deterministic parameter init (shapes from the module's __init__)
# ---------------------------------------------------------------------------
def init_params(key, node_dim, edge_dim):
    def linear_init(k, fan_in, fan_out):
        k1, k2 = jax.random.split(k)
        bound = 1.0 / jnp.sqrt(fan_in)
        w = jax.random.uniform(k1, (fan_in, fan_out), jnp.float32, -bound, bound)
        b = jax.random.uniform(k2, (fan_out,), jnp.float32, -bound, bound)
        return w, b

    ks = jax.random.split(key, 5)
    conv_in = 2 * node_dim + edge_dim
    mlp_in = 2 * node_dim + edge_dim
    return {
        "conv": linear_init(ks[0], conv_in, node_dim),
        "mlp": (
            linear_init(ks[1], mlp_in, 256),
            linear_init(ks[2], 256, 128),
            linear_init(ks[3], 128, 64),
            linear_init(ks[4], 64, 1),
        ),
    }


# ---------------------------------------------------------------------------
if __name__ == "__main__":
    node_dim = 16
    edge_dim = 8
    num_layers = 2
    num_nodes = 32
    num_edges = 64

    key = jax.random.PRNGKey(0)
    k_x, k_ei, k_ef, k_p = jax.random.split(key, 4)

    x = jax.random.normal(k_x, (num_nodes, node_dim), jnp.float32)
    edge_index = jax.random.randint(k_ei, (2, num_edges), 0, num_nodes,
                                    dtype=jnp.int32)
    edge_features = jax.random.normal(k_ef, (num_edges, edge_dim), jnp.float32)

    params = init_params(k_p, node_dim, edge_dim)

    fwd = jax.jit(functools.partial(custom_graph_sage_forward,
                                    num_layers=num_layers))
    pred = jax.block_until_ready(fwd(x, edge_index, edge_features, params))

    assert pred.shape == (num_edges, 1), pred.shape
    assert bool(jnp.all(jnp.isfinite(pred)))
    print("KERNEL_OK")
</pallas_src>

<mosaic_0001>
module attributes {stable_mosaic.version = 11 : i64} {
  func.func private @main(%arg0: i32) attributes {dimension_semantics = [#tpu.dimension_semantics<core_parallel>], iteration_bounds = array<i64: 2>, tpu.core_type = #tpu.core_type<sc_scalar_subcore>, window_params = []} {
    return
  }
}

module attributes {stable_mosaic.version = 11 : i64} {
  func.func private @main(%arg0: i32) attributes {dimension_semantics = [#tpu.dimension_semantics<core_parallel>], iteration_bounds = array<i64: 2>, tpu.core_type = #tpu.core_type<sc_scalar_subcore>, window_params = []} {
    return
  }
}

module attributes {stable_mosaic.version = 11 : i64} {
  func.func @_node_phase_kernel(%arg0: i32, %arg1: memref<32x16xbf16, #tpu.memory_space<vmem>>, %arg2: memref<32x32xbf16, #tpu.memory_space<vmem>>, %arg3: memref<32x1xf32, #tpu.memory_space<vmem>>, %arg4: memref<32x8xbf16, #tpu.memory_space<vmem>>, %arg5: memref<16x16xbf16, #tpu.memory_space<vmem>>, %arg6: memref<16x16xbf16, #tpu.memory_space<vmem>>, %arg7: memref<8x16xbf16, #tpu.memory_space<vmem>>, %arg8: memref<1x16xf32, #tpu.memory_space<vmem>>, %arg9: memref<32x16xf32, #tpu.memory_space<vmem>>) attributes {dimension_semantics = [#tpu.dimension_semantics<arbitrary>], iteration_bounds = array<i64: 1>, scalar_prefetch = 0 : i64, scratch_operands = 0 : i64, tpu.core_type = #tpu.core_type<tc>, window_params = [{pipeline_mode = #tpu.pipeline_mode<synchronous>, transform_indices = @transform_0, window_bounds = array<i64: 32, 16>}, {pipeline_mode = #tpu.pipeline_mode<synchronous>, transform_indices = @transform_1, window_bounds = array<i64: 32, 32>}, {pipeline_mode = #tpu.pipeline_mode<synchronous>, transform_indices = @transform_2, window_bounds = array<i64: 32, 1>}, {pipeline_mode = #tpu.pipeline_mode<synchronous>, transform_indices = @transform_3, window_bounds = array<i64: 32, 8>}, {pipeline_mode = #tpu.pipeline_mode<synchronous>, transform_indices = @transform_4, window_bounds = array<i64: 16, 16>}, {pipeline_mode = #tpu.pipeline_mode<synchronous>, transform_indices = @transform_5, window_bounds = array<i64: 16, 16>}, {pipeline_mode = #tpu.pipeline_mode<synchronous>, transform_indices = @transform_6, window_bounds = array<i64: 8, 16>}, {pipeline_mode = #tpu.pipeline_mode<synchronous>, transform_indices = @transform_7, window_bounds = array<i64: 1, 16>}, {pipeline_mode = #tpu.pipeline_mode<synchronous>, transform_indices = @transform_8, window_bounds = array<i64: 32, 16>}]} {
    %c0 = arith.constant 0 : index
    %c0_0 = arith.constant 0 : index
    %0 = vector.load %arg4[%c0, %c0_0] : memref<32x8xbf16, #tpu.memory_space<vmem>>, vector<32x8xbf16>
    %c0_1 = arith.constant 0 : index
    %c0_2 = arith.constant 0 : index
    %1 = vector.load %arg7[%c0_1, %c0_2] : memref<8x16xbf16, #tpu.memory_space<vmem>>, vector<8x16xbf16>
    %cst = arith.constant dense<0.000000e+00> : vector<32x16xf32>
    %2 = tpu.matmul %0, %1, %cst {dimension_numbers = #tpu.dot_dimension_numbers<[1], [0], [0], [1], [0, 0, 1, 1], [], []>} : vector<32x8xbf16>, vector<8x16xbf16>, vector<32x16xf32> -> vector<32x16xf32>
    %c0_3 = arith.constant 0 : index
    %c0_4 = arith.constant 0 : index
    %3 = vector.load %arg8[%c0_3, %c0_4] : memref<1x16xf32, #tpu.memory_space<vmem>>, vector<1x16xf32>
    %4 = vector.broadcast %3 : vector<1x16xf32> to vector<32x16xf32>
    %5 = arith.addf %2, %4 : vector<32x16xf32>
    %c0_5 = arith.constant 0 : index
    %c0_6 = arith.constant 0 : index
    %6 = vector.load %arg2[%c0_5, %c0_6] : memref<32x32xbf16, #tpu.memory_space<vmem>>, vector<32x32xbf16>
    %c0_7 = arith.constant 0 : index
    %c0_8 = arith.constant 0 : index
    %7 = vector.load %arg3[%c0_7, %c0_8] : memref<32x1xf32, #tpu.memory_space<vmem>>, vector<32x1xf32>
    %c0_9 = arith.constant 0 : index
    %c0_10 = arith.constant 0 : index
    %8 = vector.load %arg5[%c0_9, %c0_10] : memref<16x16xbf16, #tpu.memory_space<vmem>>, vector<16x16xbf16>
    %c0_11 = arith.constant 0 : index
    %c0_12 = arith.constant 0 : index
    %9 = vector.load %arg6[%c0_11, %c0_12] : memref<16x16xbf16, #tpu.memory_space<vmem>>, vector<16x16xbf16>
    %c0_13 = arith.constant 0 : index
    %c0_14 = arith.constant 0 : index
    %10 = vector.load %arg1[%c0_13, %c0_14] : memref<32x16xbf16, #tpu.memory_space<vmem>>, vector<32x16xbf16>
    %cst_15 = arith.constant dense<0.000000e+00> : vector<32x16xf32>
    %11 = tpu.matmul %10, %8, %cst_15 {dimension_numbers = #tpu.dot_dimension_numbers<[1], [0], [0], [1], [0, 0, 1, 1], [], []>} : vector<32x16xbf16>, vector<16x16xbf16>, vector<32x16xf32> -> vector<32x16xf32>
    %cst_16 = arith.constant dense<0.000000e+00> : vector<32x16xf32>
    %12 = tpu.matmul %6, %10, %cst_16 {dimension_numbers = #tpu.dot_dimension_numbers<[1], [0], [0], [1], [0, 0, 1, 1], [], []>} : vector<32x32xbf16>, vector<32x16xbf16>, vector<32x16xf32> -> vector<32x16xf32>
    %13 = vector.broadcast %7 : vector<32x1xf32> to vector<32x16xf32>
    %14 = arith.mulf %12, %13 : vector<32x16xf32>
    %15 = arith.truncf %14 : vector<32x16xf32> to vector<32x16xbf16>
    %cst_17 = arith.constant dense<0.000000e+00> : vector<32x16xf32>
    %16 = tpu.matmul %15, %9, %cst_17 {dimension_numbers = #tpu.dot_dimension_numbers<[1], [0], [0], [1], [0, 0, 1, 1], [], []>} : vector<32x16xbf16>, vector<16x16xbf16>, vector<32x16xf32> -> vector<32x16xf32>
    %17 = arith.addf %11, %16 : vector<32x16xf32>
    %18 = arith.addf %17, %5 : vector<32x16xf32>
    %cst_18 = arith.constant 0.000000e+00 : f32
    %19 = vector.broadcast %cst_18 : f32 to vector<32x16xf32>
    %20 = arith.maximumf %18, %19 : vector<32x16xf32>
    %21 = arith.truncf %20 : vector<32x16xf32> to vector<32x16xbf16>
    %cst_19 = arith.constant dense<0.000000e+00> : vector<32x16xf32>
    %22 = tpu.matmul %21, %8, %cst_19 {dimension_numbers = #tpu.dot_dimension_numbers<[1], [0], [0], [1], [0, 0, 1, 1], [], []>} : vector<32x16xbf16>, vector<16x16xbf16>, vector<32x16xf32> -> vector<32x16xf32>
    %cst_20 = arith.constant dense<0.000000e+00> : vector<32x16xf32>
    %23 = tpu.matmul %6, %21, %cst_20 {dimension_numbers = #tpu.dot_dimension_numbers<[1], [0], [0], [1], [0, 0, 1, 1], [], []>} : vector<32x32xbf16>, vector<32x16xbf16>, vector<32x16xf32> -> vector<32x16xf32>
    %24 = vector.broadcast %7 : vector<32x1xf32> to vector<32x16xf32>
    %25 = arith.mulf %23, %24 : vector<32x16xf32>
    %26 = arith.truncf %25 : vector<32x16xf32> to vector<32x16xbf16>
    %cst_21 = arith.constant dense<0.000000e+00> : vector<32x16xf32>
    %27 = tpu.matmul %26, %9, %cst_21 {dimension_numbers = #tpu.dot_dimension_numbers<[1], [0], [0], [1], [0, 0, 1, 1], [], []>} : vector<32x16xbf16>, vector<16x16xbf16>, vector<32x16xf32> -> vector<32x16xf32>
    %28 = arith.addf %22, %27 : vector<32x16xf32>
    %29 = arith.addf %28, %5 : vector<32x16xf32>
    %cst_22 = arith.constant 0.000000e+00 : f32
    %30 = vector.broadcast %cst_22 : f32 to vector<32x16xf32>
    %31 = arith.maximumf %29, %30 : vector<32x16xf32>
    %c0_23 = arith.constant 0 : index
    %c0_24 = arith.constant 0 : index
    %32 = vector.load %arg9[%c0_23, %c0_24] : memref<32x16xf32, #tpu.memory_space<vmem>>, vector<32x16xf32>
    tpu.vector_store %arg9[%c0_23, %c0_24], %31 {strides = array<i32>} : memref<32x16xf32, #tpu.memory_space<vmem>>, vector<32x16xf32>,
    return
  }
  func.func @transform_0(%arg0: i32) -> (i32, i32) {
    %c0_i32 = arith.constant 0 : i32
    %c0_i32_0 = arith.constant 0 : i32
    %c0_i32_1 = arith.constant 0 : i32
    return %c0_i32, %c0_i32_0 : i32, i32
  }
  func.func @transform_1(%arg0: i32) -> (i32, i32) {
    %c0_i32 = arith.constant 0 : i32
    %c0_i32_0 = arith.constant 0 : i32
    %c0_i32_1 = arith.constant 0 : i32
    return %c0_i32, %c0_i32_0 : i32, i32
  }
  func.func @transform_2(%arg0: i32) -> (i32, i32) {
    %c0_i32 = arith.constant 0 : i32
    %c0_i32_0 = arith.constant 0 : i32
    %c0_i32_1 = arith.constant 0 : i32
    return %c0_i32, %c0_i32_0 : i32, i32
  }
  func.func @transform_3(%arg0: i32) -> (i32, i32) {
    %c0_i32 = arith.constant 0 : i32
    %c0_i32_0 = arith.constant 0 : i32
    %c0_i32_1 = arith.constant 0 : i32
    return %c0_i32, %c0_i32_0 : i32, i32
  }
  func.func @transform_4(%arg0: i32) -> (i32, i32) {
    %c0_i32 = arith.constant 0 : i32
    %c0_i32_0 = arith.constant 0 : i32
    %c0_i32_1 = arith.constant 0 : i32
    return %c0_i32, %c0_i32_0 : i32, i32
  }
  func.func @transform_5(%arg0: i32) -> (i32, i32) {
    %c0_i32 = arith.constant 0 : i32
    %c0_i32_0 = arith.constant 0 : i32
    %c0_i32_1 = arith.constant 0 : i32
    return %c0_i32, %c0_i32_0 : i32, i32
  }
  func.func @transform_6(%arg0: i32) -> (i32, i32) {
    %c0_i32 = arith.constant 0 : i32
    %c0_i32_0 = arith.constant 0 : i32
    %c0_i32_1 = arith.constant 0 : i32
    return %c0_i32, %c0_i32_0 : i32, i32
  }
  func.func @transform_7(%arg0: i32) -> (i32, i32) {
    %c0_i32 = arith.constant 0 : i32
    %c0_i32_0 = arith.constant 0 : i32
    %c0_i32_1 = arith.constant 0 : i32
    return %c0_i32, %c0_i32_0 : i32, i32
  }
  func.func @transform_8(%arg0: i32) -> (i32, i32) {
    %c0_i32 = arith.constant 0 : i32
    %c0_i32_0 = arith.constant 0 : i32
    %c0_i32_1 = arith.constant 0 : i32
    return %c0_i32, %c0_i32_0 : i32, i32
  }
}

module attributes {stable_mosaic.version = 11 : i64} {
  func.func @_edge_phase_kernel(%arg0: i32, %arg1: memref<64xi32, #tpu.memory_space<smem>>, %arg2: memref<64xi32, #tpu.memory_space<smem>>, %arg3: memref<32x16xf32, #tpu.memory_space<vmem>>, %arg4: memref<64x8xbf16, #tpu.memory_space<vmem>>, %arg5: memref<16x256xbf16, #tpu.memory_space<vmem>>, %arg6: memref<16x256xbf16, #tpu.memory_space<vmem>>, %arg7: memref<8x256xbf16, #tpu.memory_space<vmem>>, %arg8: memref<1x256xf32, #tpu.memory_space<vmem>>, %arg9: memref<256x128xbf16, #tpu.memory_space<vmem>>, %arg10: memref<1x128xf32, #tpu.memory_space<vmem>>, %arg11: memref<128x64xbf16, #tpu.memory_space<vmem>>, %arg12: memref<1x64xf32, #tpu.memory_space<vmem>>, %arg13: memref<1x64xf32, #tpu.memory_space<vmem>>, %arg14: memref<1x1xf32, #tpu.memory_space<vmem>>, %arg15: memref<64x1xf32, #tpu.memory_space<vmem>>, %arg16: memref<64x16xf32, #tpu.memory_space<vmem>>, %arg17: memref<64x16xf32, #tpu.memory_space<vmem>>) attributes {dimension_semantics = [#tpu.dimension_semantics<parallel>], iteration_bounds = array<i64: 1>, scalar_prefetch = 2 : i64, scratch_operands = 2 : i64, tpu.core_type = #tpu.core_type<tc>, window_params = [{pipeline_mode = #tpu.pipeline_mode<synchronous>, transform_indices = @transform_0, window_bounds = array<i64: 32, 16>}, {transform_indices = @transform_1, window_bounds = array<i64: 64, 8>}, {pipeline_mode = #tpu.pipeline_mode<synchronous>, transform_indices = @transform_2, window_bounds = array<i64: 16, 256>}, {pipeline_mode = #tpu.pipeline_mode<synchronous>, transform_indices = @transform_3, window_bounds = array<i64: 16, 256>}, {pipeline_mode = #tpu.pipeline_mode<synchronous>, transform_indices = @transform_4, window_bounds = array<i64: 8, 256>}, {pipeline_mode = #tpu.pipeline_mode<synchronous>, transform_indices = @transform_5, window_bounds = array<i64: 1, 256>}, {pipeline_mode = #tpu.pipeline_mode<synchronous>, transform_indices = @transform_6, window_bounds = array<i64: 256, 128>}, {pipeline_mode = #tpu.pipeline_mode<synchronous>, transform_indices = @transform_7, window_bounds = array<i64: 1, 128>}, {pipeline_mode = #tpu.pipeline_mode<synchronous>, transform_indices = @transform_8, window_bounds = array<i64: 128, 64>}, {pipeline_mode = #tpu.pipeline_mode<synchronous>, transform_indices = @transform_9, window_bounds = array<i64: 1, 64>}, {pipeline_mode = #tpu.pipeline_mode<synchronous>, transform_indices = @transform_10, window_bounds = array<i64: 1, 64>}, {pipeline_mode = #tpu.pipeline_mode<synchronous>, transform_indices = @transform_11, window_bounds = array<i64: 1, 1>}, {transform_indices = @transform_12, window_bounds = array<i64: 64, 1>}]} {
    %c64_i32 = arith.constant 64 : i32
    %0 = arith.muli %arg0, %c64_i32 : i32
    %c0_i32 = arith.constant 0 : i32
    %c64_i32_0 = arith.constant 64 : i32
    %1 = arith.addi %c0_i32, %c64_i32_0 : i32
    %c1_i32 = arith.constant 1 : i32
    scf.for %arg18 = %c0_i32 to %1 step %c1_i32  : i32 {
      %45 = arith.addi %0, %arg18 : i32
      %46 = arith.index_cast %45 : i32 to index
      %47 = memref.load %arg1[%46] : memref<64xi32, #tpu.memory_space<smem>>
      %48 = arith.addi %0, %arg18 : i32
      %49 = arith.index_cast %48 : i32 to index
      %50 = memref.load %arg2[%49] : memref<64xi32, #tpu.memory_space<smem>>
      %51 = arith.index_cast %47 : i32 to index
      %c0_37 = arith.constant 0 : index
      %52 = vector.load %arg3[%51, %c0_37] : memref<32x16xf32, #tpu.memory_space<vmem>>, vector<1x16xf32>
      %53 = arith.index_cast %arg18 : i32 to index
      %c0_38 = arith.constant 0 : index
      %54 = vector.load %arg16[%53, %c0_38] : memref<64x16xf32, #tpu.memory_space<vmem>>, vector<1x16xf32>
      tpu.vector_store %arg16[%53, %c0_38], %52 {strides = array<i32>} : memref<64x16xf32, #tpu.memory_space<vmem>>, vector<1x16xf32>,
      %55 = arith.index_cast %50 : i32 to index
      %c0_39 = arith.constant 0 : index
      %56 = vector.load %arg3[%55, %c0_39] : memref<32x16xf32, #tpu.memory_space<vmem>>, vector<1x16xf32>
      %57 = arith.index_cast %arg18 : i32 to index
      %c0_40 = arith.constant 0 : index
      %58 = vector.load %arg17[%57, %c0_40] : memref<64x16xf32, #tpu.memory_space<vmem>>, vector<1x16xf32>
      tpu.vector_store %arg17[%57, %c0_40], %56 {strides = array<i32>} : memref<64x16xf32, #tpu.memory_space<vmem>>, vector<1x16xf32>,
    }
    %c64_i32_1 = arith.constant 64 : i32
    %c0 = arith.constant 0 : index
    %c0_2 = arith.constant 0 : index
    %2 = vector.load %arg16[%c0, %c0_2] : memref<64x16xf32, #tpu.memory_space<vmem>>, vector<64x16xf32>
    %3 = arith.truncf %2 : vector<64x16xf32> to vector<64x16xbf16>
    %c0_3 = arith.constant 0 : index
    %c0_4 = arith.constant 0 : index
    %4 = vector.load %arg5[%c0_3, %c0_4] : memref<16x256xbf16, #tpu.memory_space<vmem>>, vector<16x256xbf16>
    %cst = arith.constant dense<0.000000e+00> : vector<64x256xf32>
    %5 = tpu.matmul %3, %4, %cst {dimension_numbers = #tpu.dot_dimension_numbers<[1], [0], [0], [1], [0, 0, 1, 1], [], []>} : vector<64x16xbf16>, vector<16x256xbf16>, vector<64x256xf32> -> vector<64x256xf32>
    %c0_5 = arith.constant 0 : index
    %c0_6 = arith.constant 0 : index
    %6 = vector.load %arg17[%c0_5, %c0_6] : memref<64x16xf32, #tpu.memory_space<vmem>>, vector<64x16xf32>
    %7 = arith.truncf %6 : vector<64x16xf32> to vector<64x16xbf16>
    %c0_7 = arith.constant 0 : index
    %c0_8 = arith.constant 0 : index
    %8 = vector.load %arg6[%c0_7, %c0_8] : memref<16x256xbf16, #tpu.memory_space<vmem>>, vector<16x256xbf16>
    %cst_9 = arith.constant dense<0.000000e+00> : vector<64x256xf32>
    %9 = tpu.matmul %7, %8, %cst_9 {dimension_numbers = #tpu.dot_dimension_numbers<[1], [0], [0], [1], [0, 0, 1, 1], [], []>} : vector<64x16xbf16>, vector<16x256xbf16>, vector<64x256xf32> -> vector<64x256xf32>
    %10 = arith.addf %5, %9 : vector<64x256xf32>
    %c0_10 = arith.constant 0 : index
    %c0_11 = arith.constant 0 : index
    %11 = vector.load %arg4[%c0_10, %c0_11] : memref<64x8xbf16, #tpu.memory_space<vmem>>, vector<64x8xbf16>
    %c0_12 = arith.constant 0 : index
    %c0_13 = arith.constant 0 : index
    %12 = vector.load %arg7[%c0_12, %c0_13] : memref<8x256xbf16, #tpu.memory_space<vmem>>, vector<8x256xbf16>
    %cst_14 = arith.constant dense<0.000000e+00> : vector<64x256xf32>
    %13 = tpu.matmul %11, %12, %cst_14 {dimension_numbers = #tpu.dot_dimension_numbers<[1], [0], [0], [1], [0, 0, 1, 1], [], []>} : vector<64x8xbf16>, vector<8x256xbf16>, vector<64x256xf32> -> vector<64x256xf32>
    %14 = arith.addf %10, %13 : vector<64x256xf32>
    %c0_15 = arith.constant 0 : index
    %c0_16 = arith.constant 0 : index
    %15 = vector.load %arg8[%c0_15, %c0_16] : memref<1x256xf32, #tpu.memory_space<vmem>>, vector<1x256xf32>
    %16 = vector.broadcast %15 : vector<1x256xf32> to vector<64x256xf32>
    %17 = arith.addf %14, %16 : vector<64x256xf32>
    %cst_17 = arith.constant 0.000000e+00 : f32
    %18 = vector.broadcast %cst_17 : f32 to vector<64x256xf32>
    %19 = arith.maximumf %17, %18 : vector<64x256xf32>
    %20 = arith.truncf %19 : vector<64x256xf32> to vector<64x256xbf16>
    %c0_18 = arith.constant 0 : index
    %c0_19 = arith.constant 0 : index
    %21 = vector.load %arg9[%c0_18, %c0_19] : memref<256x128xbf16, #tpu.memory_space<vmem>>, vector<256x128xbf16>
    %cst_20 = arith.constant dense<0.000000e+00> : vector<64x128xf32>
    %22 = tpu.matmul %20, %21, %cst_20 {dimension_numbers = #tpu.dot_dimension_numbers<[1], [0], [0], [1], [0, 0, 1, 1], [], []>} : vector<64x256xbf16>, vector<256x128xbf16>, vector<64x128xf32> -> vector<64x128xf32>
    %c0_21 = arith.constant 0 : index
    %c0_22 = arith.constant 0 : index
    %23 = vector.load %arg10[%c0_21, %c0_22] : memref<1x128xf32, #tpu.memory_space<vmem>>, vector<1x128xf32>
    %24 = vector.broadcast %23 : vector<1x128xf32> to vector<64x128xf32>
    %25 = arith.addf %22, %24 : vector<64x128xf32>
    %cst_23 = arith.constant 0.000000e+00 : f32
    %26 = vector.broadcast %cst_23 : f32 to vector<64x128xf32>
    %27 = arith.maximumf %25, %26 : vector<64x128xf32>
    %28 = arith.truncf %27 : vector<64x128xf32> to vector<64x128xbf16>
    %c0_24 = arith.constant 0 : index
    %c0_25 = arith.constant 0 : index
    %29 = vector.load %arg11[%c0_24, %c0_25] : memref<128x64xbf16, #tpu.memory_space<vmem>>, vector<128x64xbf16>
    %cst_26 = arith.constant dense<0.000000e+00> : vector<64x64xf32>
    %30 = tpu.matmul %28, %29, %cst_26 {dimension_numbers = #tpu.dot_dimension_numbers<[1], [0], [0], [1], [0, 0, 1, 1], [], []>} : vector<64x128xbf16>, vector<128x64xbf16>, vector<64x64xf32> -> vector<64x64xf32>
    %c0_27 = arith.constant 0 : index
    %c0_28 = arith.constant 0 : index
    %31 = vector.load %arg12[%c0_27, %c0_28] : memref<1x64xf32, #tpu.memory_space<vmem>>, vector<1x64xf32>
    %32 = vector.broadcast %31 : vector<1x64xf32> to vector<64x64xf32>
    %33 = arith.addf %30, %32 : vector<64x64xf32>
    %cst_29 = arith.constant 0.000000e+00 : f32
    %34 = vector.broadcast %cst_29 : f32 to vector<64x64xf32>
    %35 = arith.maximumf %33, %34 : vector<64x64xf32>
    %c0_30 = arith.constant 0 : index
    %c0_31 = arith.constant 0 : index
    %36 = vector.load %arg13[%c0_30, %c0_31] : memref<1x64xf32, #tpu.memory_space<vmem>>, vector<1x64xf32>
    %37 = vector.broadcast %36 : vector<1x64xf32> to vector<64x64xf32>
    %38 = arith.mulf %35, %37 : vector<64x64xf32>
    %cst_32 = arith.constant dense<0.000000e+00> : vector<64xf32>
    %39 = vector.multi_reduction <add>, %38, %cst_32 [1] : vector<64x64xf32> to vector<64xf32>
    %40 = vector.shape_cast %39 : vector<64xf32> to vector<64x1xf32>
    %c0_33 = arith.constant 0 : index
    %c0_34 = arith.constant 0 : index
    %41 = vector.load %arg14[%c0_33, %c0_34] : memref<1x1xf32, #tpu.memory_space<vmem>>, vector<1x1xf32>
    %42 = vector.broadcast %41 : vector<1x1xf32> to vector<64x1xf32>
    %43 = arith.addf %40, %42 : vector<64x1xf32>
    %c0_35 = arith.constant 0 : index
    %c0_36 = arith.constant 0 : index
    %44 = vector.load %arg15[%c0_35, %c0_36] : memref<64x1xf32, #tpu.memory_space<vmem>>, vector<64x1xf32>
    tpu.vector_store %arg15[%c0_35, %c0_36], %43 {strides = array<i32>} : memref<64x1xf32, #tpu.memory_space<vmem>>, vector<64x1xf32>,
    return
  }
  func.func @transform_0(%arg0: i32, %arg1: memref<64xi32, #tpu.memory_space<smem>>, %arg2: memref<64xi32, #tpu.memory_space<smem>>) -> (i32, i32) {
    %c0_i32 = arith.constant 0 : i32
    %c0_i32_0 = arith.constant 0 : i32
    %c0_i32_1 = arith.constant 0 : i32
    return %c0_i32, %c0_i32_0 : i32, i32
  }
  func.func @transform_1(%arg0: i32, %arg1: memref<64xi32, #tpu.memory_space<smem>>, %arg2: memref<64xi32, #tpu.memory_space<smem>>) -> (i32, i32) {
    %c0_i32 = arith.constant 0 : i32
    %c0_i32_0 = arith.constant 0 : i32
    return %arg0, %c0_i32 : i32, i32
  }
  func.func @transform_2(%arg0: i32, %arg1: memref<64xi32, #tpu.memory_space<smem>>, %arg2: memref<64xi32, #tpu.memory_space<smem>>) -> (i32, i32) {
    %c0_i32 = arith.constant 0 : i32
    %c0_i32_0 = arith.constant 0 : i32
    %c0_i32_1 = arith.constant 0 : i32
    return %c0_i32, %c0_i32_0 : i32, i32
  }
  func.func @transform_3(%arg0: i32, %arg1: memref<64xi32, #tpu.memory_space<smem>>, %arg2: memref<64xi32, #tpu.memory_space<smem>>) -> (i32, i32) {
    %c0_i32 = arith.constant 0 : i32
    %c0_i32_0 = arith.constant 0 : i32
    %c0_i32_1 = arith.constant 0 : i32
    return %c0_i32, %c0_i32_0 : i32, i32
  }
  func.func @transform_4(%arg0: i32, %arg1: memref<64xi32, #tpu.memory_space<smem>>, %arg2: memref<64xi32, #tpu.memory_space<smem>>) -> (i32, i32) {
    %c0_i32 = arith.constant 0 : i32
    %c0_i32_0 = arith.constant 0 : i32
    %c0_i32_1 = arith.constant 0 : i32
    return %c0_i32, %c0_i32_0 : i32, i32
  }
  func.func @transform_5(%arg0: i32, %arg1: memref<64xi32, #tpu.memory_space<smem>>, %arg2: memref<64xi32, #tpu.memory_space<smem>>) -> (i32, i32) {
    %c0_i32 = arith.constant 0 : i32
    %c0_i32_0 = arith.constant 0 : i32
    %c0_i32_1 = arith.constant 0 : i32
    return %c0_i32, %c0_i32_0 : i32, i32
  }
  func.func @transform_6(%arg0: i32, %arg1: memref<64xi32, #tpu.memory_space<smem>>, %arg2: memref<64xi32, #tpu.memory_space<smem>>) -> (i32, i32) {
    %c0_i32 = arith.constant 0 : i32
    %c0_i32_0 = arith.constant 0 : i32
    %c0_i32_1 = arith.constant 0 : i32
    return %c0_i32, %c0_i32_0 : i32, i32
  }
  func.func @transform_7(%arg0: i32, %arg1: memref<64xi32, #tpu.memory_space<smem>>, %arg2: memref<64xi32, #tpu.memory_space<smem>>) -> (i32, i32) {
    %c0_i32 = arith.constant 0 : i32
    %c0_i32_0 = arith.constant 0 : i32
    %c0_i32_1 = arith.constant 0 : i32
    return %c0_i32, %c0_i32_0 : i32, i32
  }
  func.func @transform_8(%arg0: i32, %arg1: memref<64xi32, #tpu.memory_space<smem>>, %arg2: memref<64xi32, #tpu.memory_space<smem>>) -> (i32, i32) {
    %c0_i32 = arith.constant 0 : i32
    %c0_i32_0 = arith.constant 0 : i32
    %c0_i32_1 = arith.constant 0 : i32
    return %c0_i32, %c0_i32_0 : i32, i32
  }
  func.func @transform_9(%arg0: i32, %arg1: memref<64xi32, #tpu.memory_space<smem>>, %arg2: memref<64xi32, #tpu.memory_space<smem>>) -> (i32, i32) {
    %c0_i32 = arith.constant 0 : i32
    %c0_i32_0 = arith.constant 0 : i32
    %c0_i32_1 = arith.constant 0 : i32
    return %c0_i32, %c0_i32_0 : i32, i32
  }
  func.func @transform_10(%arg0: i32, %arg1: memref<64xi32, #tpu.memory_space<smem>>, %arg2: memref<64xi32, #tpu.memory_space<smem>>) -> (i32, i32) {
    %c0_i32 = arith.constant 0 : i32
    %c0_i32_0 = arith.constant 0 : i32
    %c0_i32_1 = arith.constant 0 : i32
    return %c0_i32, %c0_i32_0 : i32, i32
  }
  func.func @transform_11(%arg0: i32, %arg1: memref<64xi32, #tpu.memory_space<smem>>, %arg2: memref<64xi32, #tpu.memory_space<smem>>) -> (i32, i32) {
    %c0_i32 = arith.constant 0 : i32
    %c0_i32_0 = arith.constant 0 : i32
    %c0_i32_1 = arith.constant 0 : i32
    return %c0_i32, %c0_i32_0 : i32, i32
  }
  func.func @transform_12(%arg0: i32, %arg1: memref<64xi32, #tpu.memory_space<smem>>, %arg2: memref<64xi32, #tpu.memory_space<smem>>) -> (i32, i32) {
    %c0_i32 = arith.constant 0 : i32
    %c0_i32_0 = arith.constant 0 : i32
    return %arg0, %c0_i32 : i32, i32
  }
}

</mosaic_0001>

<llo_original>
// kernel: custom_graph_sage_forward.2
$region0: #{custom_graph_sage_forward.2}
  #allocation0 [shape = 'u32[]', space=smem, size = 0x4, offset = 0x4, fixed_abs, tag = 'smem constant byte address 0x4 - core index']
  #allocation1 [shape = 'u32[144,128]{1,0:T(1,128)}', space=vmem, size = 0x12000, scoped, tag = 'internal scratch']
  %s0 = inlined_call_operand.vmem [shape: bf16[32,16], index: 0, kind: input, shape index: {}]
  %s1 = inlined_call_operand.vmem [shape: bf16[32,32], index: 1, kind: input, shape index: {}]
  %s2 = inlined_call_operand.vmem [shape: f32[32,1], index: 2, kind: input, shape index: {}]
  %s3 = inlined_call_operand.vmem [shape: bf16[32,8], index: 3, kind: input, shape index: {}]
  %s4 = inlined_call_operand.vmem [shape: bf16[16,16], index: 4, kind: input, shape index: {}]
  %s5 = inlined_call_operand.vmem [shape: bf16[16,16], index: 5, kind: input, shape index: {}]
  %s6 = inlined_call_operand.vmem [shape: bf16[8,16], index: 6, kind: input, shape index: {}]
  %s7 = inlined_call_operand.vmem [shape: f32[1,16], index: 7, kind: input, shape index: {}]
  %s8 = inlined_call_operand.vmem [shape: f32[32,16], index: 8, kind: output, shape index: {}]
  %s9 = sld [smem:[#allocation0]]
  $region42: #{custom_graph_sage_forward.2} parent=0
    _
  %s11 = ssub.s32 1, %s9
  %s12 = scalar_select 0, %s11, %s9
  // Predicated region
  $region2: #{custom_graph_sage_forward.2} parent=0 // pred_check
    _
  $region3: #{custom_graph_sage_forward.2} parent=0 // pred_check_branch
    %14 = sbr.rel (0) target = $region5
  $region4: #{custom_graph_sage_forward.2} parent=0 // pred_region
    _
  $region5: #{custom_graph_sage_forward.2} parent=0 // pred_fallthru
    _
  // Predicated region
  $region6: #{custom_graph_sage_forward.2} parent=0 // pred_check
    _
  $region7: #{custom_graph_sage_forward.2} parent=0 // pred_check_branch
    %16 = sbr.rel (0) target = $region9
  $region8: #{custom_graph_sage_forward.2} parent=0 // pred_region
    _
  $region9: #{custom_graph_sage_forward.2} parent=0 // pred_fallthru
    _
  // Predicated region
  $region10: #{custom_graph_sage_forward.2} parent=0 // pred_check
    _
  $region11: #{custom_graph_sage_forward.2} parent=0 // pred_check_branch
    %18 = sbr.rel (0) target = $region13
  $region12: #{custom_graph_sage_forward.2} parent=0 // pred_region
    _
  $region13: #{custom_graph_sage_forward.2} parent=0 // pred_fallthru
    _
  // Predicated region
  $region14: #{custom_graph_sage_forward.2} parent=0 // pred_check
    _
  $region15: #{custom_graph_sage_forward.2} parent=0 // pred_check_branch
    %20 = sbr.rel (0) target = $region17
  $region16: #{custom_graph_sage_forward.2} parent=0 // pred_region
    _
  $region17: #{custom_graph_sage_forward.2} parent=0 // pred_fallthru
    _
  // Predicated region
  $region18: #{custom_graph_sage_forward.2} parent=0 // pred_check
    _
  $region19: #{custom_graph_sage_forward.2} parent=0 // pred_check_branch
    %22 = sbr.rel (0) target = $region21
  $region20: #{custom_graph_sage_forward.2} parent=0 // pred_region
    _
  $region21: #{custom_graph_sage_forward.2} parent=0 // pred_fallthru
    _
  // Predicated region
  $region22: #{custom_graph_sage_forward.2} parent=0 // pred_check
    _
  $region23: #{custom_graph_sage_forward.2} parent=0 // pred_check_branch
    %24 = sbr.rel (0) target = $region25
  $region24: #{custom_graph_sage_forward.2} parent=0 // pred_region
    _
  $region25: #{custom_graph_sage_forward.2} parent=0 // pred_fallthru
    _
  // Predicated region
  $region26: #{custom_graph_sage_forward.2} parent=0 // pred_check
    _
  $region27: #{custom_graph_sage_forward.2} parent=0 // pred_check_branch
    %26 = sbr.rel (0) target = $region29
  $region28: #{custom_graph_sage_forward.2} parent=0 // pred_region
    _
  $region29: #{custom_graph_sage_forward.2} parent=0 // pred_fallthru
    _
  // Predicated region
  $region30: #{custom_graph_sage_forward.2} parent=0 // pred_check
    _
  $region31: #{custom_graph_sage_forward.2} parent=0 // pred_check_branch
    %28 = sbr.rel (0) target = $region33
  $region32: #{custom_graph_sage_forward.2} parent=0 // pred_region
    _
  $region33: #{custom_graph_sage_forward.2} parent=0 // pred_fallthru
    _
  %v30 = vld [vmem:[%s3] sm:$0xf]
  %v31 = vld [vmem:[%s3 + $0x4] sm:$0xf]
  %v32 = vld [vmem:[%s3 + $0x8] sm:$0xf]
  %v33 = vld [vmem:[%s3 + $0xc] sm:$0xf]
  %v34 = vld [vmem:[%s6] sm:$0xf]
  %v35 = vld [vmem:[%s7] sm:$0x1]
  %v37 = vlaneseq
  %v38 = vshrl.u32 %v37, 7
  %v39 = vsub.s32 0, %v38
  %v40 = vrot.slane %v35, %v39
  %v46 = vunpack.c.l.b16 %v30
  %v47 = vunpack.c.l.b16 %v31
  %v48 = vunpack.c.l.b16 %v32
  %v49 = vunpack.c.l.b16 %v33
  %v50 = vpack.c.b16 %v47, %v46
  %v51 = vpack.c.b16 %v49, %v48
  %vm52 = vcmask 64512
  %v54 = vsel %vm52, %v50, 0
  %v57 = vsel %vm52, %v51, 0
  %vm59 = vcmask 1043456
  %v61 = vsel %vm59, %v34, 0
  %63 = vmatprep.subr.bf16.mxu0 0
  %64 = vmatpush1.bf16.msra.mxu0 %v61
  %65 = vmatprep.subr.bf16.mxu0 0
  %66 = vmatpush1.bf16.msra.mxu0 0
  %67 = vmatprep.subr.bf16.mxu0 0
  %68 = vmatpush1.bf16.msra.mxu0 0
  %69 = vmatprep.subr.bf16.mxu0 0
  %70 = vmatpush1.bf16.msra.mxu0 0
  %71 = vmatprep.subr.bf16.mxu0 0
  %72 = vmatpush1.bf16.msra.mxu0 0
  %73 = vmatprep.subr.bf16.mxu0 0
  %74 = vmatpush1.bf16.msra.mxu0 0
  %75 = vmatprep.subr.bf16.mxu0 0
  %76 = vmatpush1.bf16.msra.mxu0 0
  %77 = vmatprep.subr.bf16.mxu0 0
  %78 = vmatpush1.bf16.msra.mxu0 0
  %79 = vmatprep.subr.bf16.mxu0 0
  %80 = vmatpush1.bf16.msra.mxu0 0
  %81 = vmatprep.subr.bf16.mxu0 0
  %82 = vmatpush1.bf16.msra.mxu0 0
  %83 = vmatprep.subr.bf16.mxu0 0
  %84 = vmatpush1.bf16.msra.mxu0 0
  %85 = vmatprep.subr.bf16.mxu0 0
  %86 = vmatpush1.bf16.msra.mxu0 0
  %87 = vmatprep.subr.bf16.mxu0 0
  %88 = vmatpush1.bf16.msra.mxu0 0
  %89 = vmatprep.subr.bf16.mxu0 0
  %90 = vmatpush1.bf16.msra.mxu0 0
  %91 = vmatprep.subr.bf16.mxu0 0
  %92 = vmatpush1.bf16.msra.mxu0 0
  %93 = vmatprep.subr.bf16.mxu0 0
  %94 = vmatpush1.bf16.msra.mxu0 0
  %95 = vmatprep.mubr.bf16.mxu0 0
  %96 = vmatmul.mubr.bf16.gmra.mrb[0].mxu0 %v54
  %v97 = vpop.f32.mrb[0].mxu0
  %v98 = vadd.f32 %v40, %v97
  %v99 = vpop.f32.mrb[0].mxu0
  %v100 = vpop.f32.mrb[0].mxu0
  %v101 = vadd.f32 %v40, %v100
  %v102 = vpop.f32.mrb[0].mxu0
  %103 = vmatprep.mubr.bf16.mxu0 0
  %104 = vmatmul.mubr.bf16.gmra.mrb[0].mxu0 %v57
  %v105 = vpop.f32.mrb[0].mxu0
  %v106 = vadd.f32 %v40, %v105
  %v107 = vpop.f32.mrb[0].mxu0
  %v108 = vpop.f32.mrb[0].mxu0
  %v109 = vadd.f32 %v40, %v108
  %v110 = vpop.f32.mrb[0].mxu0
  %111 = vdwg.mxu0
  %v112 = vld [vmem:[%s1] sm:$0xf]
  %v113 = vld [vmem:[%s1 + $0x4] sm:$0xf]
  %v114 = vld [vmem:[%s1 + $0x8] sm:$0xf]
  %v115 = vld [vmem:[%s1 + $0xc] sm:$0xf]
  %v116 = vld [vmem:[%s2] sm:$0xff]
  %v117 = vld [vmem:[%s2 + $0x8] sm:$0xff]
  %v118 = vld [vmem:[%s2 + $0x10] sm:$0xff]
  %v119 = vld [vmem:[%s2 + $0x18] sm:$0xff]
  %v120 = vld [vmem:[%s4] sm:$0xf]
  %v121 = vld [vmem:[%s4 + $0x4] sm:$0xf]
  %v122 = vld [vmem:[%s5] sm:$0xf]
  %v123 = vld [vmem:[%s5 + $0x4] sm:$0xf]
  %v124 = vld [vmem:[%s0] sm:$0xf]
  %v125 = vld [vmem:[%s0 + $0x4] sm:$0xf]
  %v126 = vld [vmem:[%s0 + $0x8] sm:$0xf]
  %v127 = vld [vmem:[%s0 + $0xc] sm:$0xf]
  %v132 = vunpack.c.l.b16 %v112
  %v133 = vunpack.c.l.b16 %v113
  %v134 = vunpack.c.l.b16 %v114
  %v135 = vunpack.c.l.b16 %v115
  %v136 = vpack.c.b16 %v133, %v132
  %v137 = vpack.c.b16 %v135, %v134
  %v142 = vunpack.c.l.b16 %v124
  %v143 = vunpack.c.l.b16 %v125
  %v144 = vunpack.c.l.b16 %v126
  %v145 = vunpack.c.l.b16 %v127
  %v146 = vpack.c.b16 %v143, %v142
  %v147 = vpack.c.b16 %v145, %v144
  %vm150 = vcmask 261120
  %v152 = vsel %vm150, %v136, 0
  %v155 = vsel %vm150, %v137, 0
  %157 = vmatprep.subr.bf16.mxu0 0
  %158 = vmatpush1.bf16.msra.mxu0 %v146
  %159 = vmatprep.subr.bf16.mxu0 0
  %160 = vmatpush1.bf16.msra.mxu0 %v147
  %161 = vmatprep.subr.bf16.mxu0 0
  %162 = vmatpush1.bf16.msra.mxu0 0
  %163 = vmatprep.subr.bf16.mxu0 0
  %164 = vmatpush1.bf16.msra.mxu0 0
  %165 = vmatprep.subr.bf16.mxu0 0
  %166 = vmatpush1.bf16.msra.mxu0 0
  %167 = vmatprep.subr.bf16.mxu0 0
  %168 = vmatpush1.bf16.msra.mxu0 0
  %169 = vmatprep.subr.bf16.mxu0 0
  %170 = vmatpush1.bf16.msra.mxu0 0
  %171 = vmatprep.subr.bf16.mxu0 0
  %172 = vmatpush1.bf16.msra.mxu0 0
  %173 = vmatprep.subr.bf16.mxu0 0
  %174 = vmatpush1.bf16.msra.mxu0 0
  %175 = vmatprep.subr.bf16.mxu0 0
  %176 = vmatpush1.bf16.msra.mxu0 0
  %177 = vmatprep.subr.bf16.mxu0 0
  %178 = vmatpush1.bf16.msra.mxu0 0
  %179 = vmatprep.subr.bf16.mxu0 0
  %180 = vmatpush1.bf16.msra.mxu0 0
  %181 = vmatprep.subr.bf16.mxu0 0
  %182 = vmatpush1.bf16.msra.mxu0 0
  %183 = vmatprep.subr.bf16.mxu0 0
  %184 = vmatpush1.bf16.msra.mxu0 0
  %185 = vmatprep.subr.bf16.mxu0 0
  %186 = vmatpush1.bf16.msra.mxu0 0
  %187 = vmatprep.subr.bf16.mxu0 0
  %188 = vmatpush1.bf16.msra.mxu0 0
  %189 = vmatprep.mubr.bf16.mxu0 0
  %190 = vmatmul.mubr.bf16.gmra.mrb[0].mxu0 %v152
  %v191 = vpop.f32.mrb[0].mxu0
  %v192 = vadd.f32 0.0, %v191
  %v193 = vpop.f32.mrb[0].mxu0
  %v194 = vpop.f32.mrb[0].mxu0
  %v195 = vadd.f32 0.0, %v194
  %v196 = vpop.f32.mrb[0].mxu0
  %197 = vmatprep.mubr.bf16.mxu0 0
  %198 = vmatmul.mubr.bf16.gmra.mrb[0].mxu0 %v155
  %v199 = vpop.f32.mrb[0].mxu0
  %v200 = vadd.f32 0.0, %v199
  %v201 = vpop.f32.mrb[0].mxu0
  %v202 = vpop.f32.mrb[0].mxu0
  %v203 = vadd.f32 0.0, %v202
  %v204 = vpop.f32.mrb[0].mxu0
  %205 = vdwg.mxu0
  %207 = vset.pattern.permute.xlu0 0
  %208 = vperm.xlu0 %207, %v116
  %v209 = vpop.permute.xlu0 %208
  %212 = vset.pattern.permute.xlu0 0
  %213 = vperm.xlu0 %212, %v117
  %v214 = vpop.permute.xlu0 %213
  %217 = vset.pattern.permute.xlu0 0
  %218 = vperm.xlu0 %217, %v118
  %v219 = vpop.permute.xlu0 %218
  %222 = vset.pattern.permute.xlu0 0
  %223 = vperm.xlu0 %222, %v119
  %v224 = vpop.permute.xlu0 %223
  %v226 = vmul.f32 %v192, %v209
  %v227 = vmul.f32 %v195, %v214
  %v228 = vmul.f32 %v200, %v219
  %v229 = vmul.f32 %v203, %v224
  %v230 = vpack.c.bf16 %v227, %v226
  %v231 = vpack.c.bf16 %v229, %v228
  %v234 = vunpack.c.l.b16 %v122
  %v235 = vunpack.c.l.b16 %v123
  %v236 = vpack.c.b16 %v235, %v234
  %vm238 = vcmask 130048
  %v240 = vsel %vm238, %v230, 0
  %v243 = vsel %vm238, %v231, 0
  %245 = vmatprep.subr.bf16.mxu0 0
  %246 = vmatpush1.bf16.msra.mxu0 %v236
  %247 = vmatprep.subr.bf16.mxu0 0
  %248 = vmatpush1.bf16.msra.mxu0 0
  %249 = vmatprep.subr.bf16.mxu0 0
  %250 = vmatpush1.bf16.msra.mxu0 0
  %251 = vmatprep.subr.bf16.mxu0 0
  %252 = vmatpush1.bf16.msra.mxu0 0
  %253 = vmatprep.subr.bf16.mxu0 0
  %254 = vmatpush1.bf16.msra.mxu0 0
  %255 = vmatprep.subr.bf16.mxu0 0
  %256 = vmatpush1.bf16.msra.mxu0 0
  %257 = vmatprep.subr.bf16.mxu0 0
  %258 = vmatpush1.bf16.msra.mxu0 0
  %259 = vmatprep.subr.bf16.mxu0 0
  %260 = vmatpush1.bf16.msra.mxu0 0
  %261 = vmatprep.subr.bf16.mxu0 0
  %262 = vmatpush1.bf16.msra.mxu0 0
  %263 = vmatprep.subr.bf16.mxu0 0
  %264 = vmatpush1.bf16.msra.mxu0 0
  %265 = vmatprep.subr.bf16.mxu0 0
  %266 = vmatpush1.bf16.msra.mxu0 0
  %267 = vmatprep.subr.bf16.mxu0 0
  %268 = vmatpush1.bf16.msra.mxu0 0
  %269 = vmatprep.subr.bf16.mxu0 0
  %270 = vmatpush1.bf16.msra.mxu0 0
  %271 = vmatprep.subr.bf16.mxu0 0
  %272 = vmatpush1.bf16.msra.mxu0 0
  %273 = vmatprep.subr.bf16.mxu0 0
  %274 = vmatpush1.bf16.msra.mxu0 0
  %275 = vmatprep.subr.bf16.mxu0 0
  %276 = vmatpush1.bf16.msra.mxu0 0
  %277 = vmatprep.mubr.bf16.mxu0 0
  %278 = vmatmul.mubr.bf16.gmra.mrb[0].mxu0 %v240
  %v279 = vpop.f32.mrb[0].mxu0
  %v280 = vadd.f32 0.0, %v279
  %v281 = vpop.f32.mrb[0].mxu0
  %v282 = vpop.f32.mrb[0].mxu0
  %v283 = vadd.f32 0.0, %v282
  %v284 = vpop.f32.mrb[0].mxu0
  %285 = vmatprep.mubr.bf16.mxu0 0
  %286 = vmatmul.mubr.bf16.gmra.mrb[0].mxu0 %v243
  %v287 = vpop.f32.mrb[0].mxu0
  %v288 = vadd.f32 0.0, %v287
  %v289 = vpop.f32.mrb[0].mxu0
  %v290 = vpop.f32.mrb[0].mxu0
  %v291 = vadd.f32 0.0, %v290
  %v292 = vpop.f32.mrb[0].mxu0
  %293 = vdwg.mxu0
  %v296 = vunpack.c.l.b16 %v120
  %v297 = vunpack.c.l.b16 %v121
  %v298 = vpack.c.b16 %v297, %v296
  %v301 = vsel %vm238, %v146, 0
  %v304 = vsel %vm238, %v147, 0
  %306 = vmatprep.subr.bf16.mxu0 0
  %307 = vmatpush1.bf16.msra.mxu0 %v298
  %308 = vmatprep.subr.bf16.mxu0 0
  %309 = vmatpush1.bf16.msra.mxu0 0
  %310 = vmatprep.subr.bf16.mxu0 0
  %311 = vmatpush1.bf16.msra.mxu0 0
  %312 = vmatprep.subr.bf16.mxu0 0
  %313 = vmatpush1.bf16.msra.mxu0 0
  %314 = vmatprep.subr.bf16.mxu0 0
  %315 = vmatpush1.bf16.msra.mxu0 0
  %316 = vmatprep.subr.bf16.mxu0 0
  %317 = vmatpush1.bf16.msra.mxu0 0
  %318 = vmatprep.subr.bf16.mxu0 0
  %319 = vmatpush1.bf16.msra.mxu0 0
  %320 = vmatprep.subr.bf16.mxu0 0
  %321 = vmatpush1.bf16.msra.mxu0 0
  %322 = vmatprep.subr.bf16.mxu0 0
  %323 = vmatpush1.bf16.msra.mxu0 0
  %324 = vmatprep.subr.bf16.mxu0 0
  %325 = vmatpush1.bf16.msra.mxu0 0
  %326 = vmatprep.subr.bf16.mxu0 0
  %327 = vmatpush1.bf16.msra.mxu0 0
  %328 = vmatprep.subr.bf16.mxu0 0
  %329 = vmatpush1.bf16.msra.mxu0 0
  %330 = vmatprep.subr.bf16.mxu0 0
  %331 = vmatpush1.bf16.msra.mxu0 0
  %332 = vmatprep.subr.bf16.mxu0 0
  %333 = vmatpush1.bf16.msra.mxu0 0
  %334 = vmatprep.subr.bf16.mxu0 0
  %335 = vmatpush1.bf16.msra.mxu0 0
  %336 = vmatprep.subr.bf16.mxu0 0
  %337 = vmatpush1.bf16.msra.mxu0 0
  %338 = vmatprep.mubr.bf16.mxu0 0
  %339 = vmatmul.mubr.bf16.gmra.mrb[0].mxu0 %v301
  %v340 = vpop.f32.mrb[0].mxu0
  %v341 = vadd.f32 %v280, %v340
  %v342 = vpop.f32.mrb[0].mxu0
  %v343 = vpop.f32.mrb[0].mxu0
  %v344 = vadd.f32 %v283, %v343
  %v345 = vpop.f32.mrb[0].mxu0
  %346 = vmatprep.mubr.bf16.mxu0 0
  %347 = vmatmul.mubr.bf16.gmra.mrb[0].mxu0 %v304
  %v348 = vpop.f32.mrb[0].mxu0
  %v349 = vadd.f32 %v288, %v348
  %v350 = vpop.f32.mrb[0].mxu0
  %v351 = vpop.f32.mrb[0].mxu0
  %v352 = vadd.f32 %v291, %v351
  %v353 = vpop.f32.mrb[0].mxu0
  %354 = vdwg.mxu0
  %v355 = vadd.f32 %v341, %v98
  %v356 = vadd.f32 %v344, %v101
  %v357 = vadd.f32 %v349, %v106
  %v358 = vadd.f32 %v352, %v109
  %v359 = vmax.f32 %v355, 0.0
  %v360 = vmax.f32 %v356, 0.0
  %v361 = vmax.f32 %v357, 0.0
  %v362 = vmax.f32 %v358, 0.0
  %v363 = vpack.c.bf16 %v360, %v359
  %v364 = vpack.c.bf16 %v362, %v361
  %365 = vmatprep.subr.bf16.mxu0 0
  %366 = vmatpush1.bf16.msra.mxu0 %v363
  %367 = vmatprep.subr.bf16.mxu0 0
  %368 = vmatpush1.bf16.msra.mxu0 %v364
  %369 = vmatprep.subr.bf16.mxu0 0
  %370 = vmatpush1.bf16.msra.mxu0 0
  %371 = vmatprep.subr.bf16.mxu0 0
  %372 = vmatpush1.bf16.msra.mxu0 0
  %373 = vmatprep.subr.bf16.mxu0 0
  %374 = vmatpush1.bf16.msra.mxu0 0
  %375 = vmatprep.subr.bf16.mxu0 0
  %376 = vmatpush1.bf16.msra.mxu0 0
  %377 = vmatprep.subr.bf16.mxu0 0
  %378 = vmatpush1.bf16.msra.mxu0 0
  %379 = vmatprep.subr.bf16.mxu0 0
  %380 = vmatpush1.bf16.msra.mxu0 0
  %381 = vmatprep.subr.bf16.mxu0 0
  %382 = vmatpush1.bf16.msra.mxu0 0
  %383 = vmatprep.subr.bf16.mxu0 0
  %384 = vmatpush1.bf16.msra.mxu0 0
  %385 = vmatprep.subr.bf16.mxu0 0
  %386 = vmatpush1.bf16.msra.mxu0 0
  %387 = vmatprep.subr.bf16.mxu0 0
  %388 = vmatpush1.bf16.msra.mxu0 0
  %389 = vmatprep.subr.bf16.mxu0 0
  %390 = vmatpush1.bf16.msra.mxu0 0
  %391 = vmatprep.subr.bf16.mxu0 0
  %392 = vmatpush1.bf16.msra.mxu0 0
  %393 = vmatprep.subr.bf16.mxu0 0
  %394 = vmatpush1.bf16.msra.mxu0 0
  %395 = vmatprep.subr.bf16.mxu0 0
  %396 = vmatpush1.bf16.msra.mxu0 0
  %397 = vmatprep.mubr.bf16.mxu0 0
  %398 = vmatmul.mubr.bf16.gmra.mrb[0].mxu0 %v152
  %v399 = vpop.f32.mrb[0].mxu0
  %v400 = vadd.f32 0.0, %v399
  %v401 = vpop.f32.mrb[0].mxu0
  %v402 = vpop.f32.mrb[0].mxu0
  %v403 = vadd.f32 0.0, %v402
  %v404 = vpop.f32.mrb[0].mxu0
  %405 = vmatprep.mubr.bf16.mxu0 0
  %406 = vmatmul.mubr.bf16.gmra.mrb[0].mxu0 %v155
  %v407 = vpop.f32.mrb[0].mxu0
  %v408 = vadd.f32 0.0, %v407
  %v409 = vpop.f32.mrb[0].mxu0
  %v410 = vpop.f32.mrb[0].mxu0
  %v411 = vadd.f32 0.0, %v410
  %v412 = vpop.f32.mrb[0].mxu0
  %413 = vdwg.mxu0
  %v414 = vmul.f32 %v400, %v209
  %v415 = vmul.f32 %v403, %v214
  %v416 = vmul.f32 %v408, %v219
  %v417 = vmul.f32 %v411, %v224
  %v418 = vpack.c.bf16 %v415, %v414
  %v419 = vpack.c.bf16 %v417, %v416
  %v421 = vsel %vm238, %v418, 0
  %v424 = vsel %vm238, %v419, 0
  %426 = vmatprep.subr.bf16.mxu0 0
  %427 = vmatpush1.bf16.msra.mxu0 %v236
  %428 = vmatprep.subr.bf16.mxu0 0
  %429 = vmatpush1.bf16.msra.mxu0 0
  %430 = vmatprep.subr.bf16.mxu0 0
  %431 = vmatpush1.bf16.msra.mxu0 0
  %432 = vmatprep.subr.bf16.mxu0 0
  %433 = vmatpush1.bf16.msra.mxu0 0
  %434 = vmatprep.subr.bf16.mxu0 0
  %435 = vmatpush1.bf16.msra.mxu0 0
  %436 = vmatprep.subr.bf16.mxu0 0
  %437 = vmatpush1.bf16.msra.mxu0 0
  %438 = vmatprep.subr.bf16.mxu0 0
  %439 = vmatpush1.bf16.msra.mxu0 0
  %440 = vmatprep.subr.bf16.mxu0 0
  %441 = vmatpush1.bf16.msra.mxu0 0
  %442 = vmatprep.subr.bf16.mxu0 0
  %443 = vmatpush1.bf16.msra.mxu0 0
  %444 = vmatprep.subr.bf16.mxu0 0
  %445 = vmatpush1.bf16.msra.mxu0 0
  %446 = vmatprep.subr.bf16.mxu0 0
  %447 = vmatpush1.bf16.msra.mxu0 0
  %448 = vmatprep.subr.bf16.mxu0 0
  %449 = vmatpush1.bf16.msra.mxu0 0
  %450 = vmatprep.subr.bf16.mxu0 0
  %451 = vmatpush1.bf16.msra.mxu0 0
  %452 = vmatprep.subr.bf16.mxu0 0
  %453 = vmatpush1.bf16.msra.mxu0 0
  %454 = vmatprep.subr.bf16.mxu0 0
  %455 = vmatpush1.bf16.msra.mxu0 0
  %456 = vmatprep.subr.bf16.mxu0 0
  %457 = vmatpush1.bf16.msra.mxu0 0
  %458 = vmatprep.mubr.bf16.mxu0 0
  %459 = vmatmul.mubr.bf16.gmra.mrb[0].mxu0 %v421
  %v460 = vpop.f32.mrb[0].mxu0
  %v461 = vadd.f32 0.0, %v460
  %v462 = vpop.f32.mrb[0].mxu0
  %v463 = vpop.f32.mrb[0].mxu0
  %v464 = vadd.f32 0.0, %v463
  %v465 = vpop.f32.mrb[0].mxu0
  %466 = vmatprep.mubr.bf16.mxu0 0
  %467 = vmatmul.mubr.bf16.gmra.mrb[0].mxu0 %v424
  %v468 = vpop.f32.mrb[0].mxu0
  %v469 = vadd.f32 0.0, %v468
  %v470 = vpop.f32.mrb[0].mxu0
  %v471 = vpop.f32.mrb[0].mxu0
  %v472 = vadd.f32 0.0, %v471
  %v473 = vpop.f32.mrb[0].mxu0
  %474 = vdwg.mxu0
  %v476 = vsel %vm238, %v363, 0
  %v479 = vsel %vm238, %v364, 0
  %481 = vmatprep.subr.bf16.mxu0 0
  %482 = vmatpush1.bf16.msra.mxu0 %v298
  %483 = vmatprep.subr.bf16.mxu0 0
  %484 = vmatpush1.bf16.msra.mxu0 0
  %485 = vmatprep.subr.bf16.mxu0 0
  %486 = vmatpush1.bf16.msra.mxu0 0
  %487 = vmatprep.subr.bf16.mxu0 0
  %488 = vmatpush1.bf16.msra.mxu0 0
  %489 = vmatprep.subr.bf16.mxu0 0
  %490 = vmatpush1.bf16.msra.mxu0 0
  %491 = vmatprep.subr.bf16.mxu0 0
  %492 = vmatpush1.bf16.msra.mxu0 0
  %493 = vmatprep.subr.bf16.mxu0 0
  %494 = vmatpush1.bf16.msra.mxu0 0
  %495 = vmatprep.subr.bf16.mxu0 0
  %496 = vmatpush1.bf16.msra.mxu0 0
  %497 = vmatprep.subr.bf16.mxu0 0
  %498 = vmatpush1.bf16.msra.mxu0 0
  %499 = vmatprep.subr.bf16.mxu0 0
  %500 = vmatpush1.bf16.msra.mxu0 0
  %501 = vmatprep.subr.bf16.mxu0 0
  %502 = vmatpush1.bf16.msra.mxu0 0
  %503 = vmatprep.subr.bf16.mxu0 0
  %504 = vmatpush1.bf16.msra.mxu0 0
  %505 = vmatprep.subr.bf16.mxu0 0
  %506 = vmatpush1.bf16.msra.mxu0 0
  %507 = vmatprep.subr.bf16.mxu0 0
  %508 = vmatpush1.bf16.msra.mxu0 0
  %509 = vmatprep.subr.bf16.mxu0 0
  %510 = vmatpush1.bf16.msra.mxu0 0
  %511 = vmatprep.subr.bf16.mxu0 0
  %512 = vmatpush1.bf16.msra.mxu0 0
  %513 = vmatprep.mubr.bf16.mxu0 0
  %514 = vmatmul.mubr.bf16.gmra.mrb[0].mxu0 %v476
  %v515 = vpop.f32.mrb[0].mxu0
  %v516 = vadd.f32 %v461, %v515
  %v517 = vpop.f32.mrb[0].mxu0
  %v518 = vpop.f32.mrb[0].mxu0
  %v519 = vadd.f32 %v464, %v518
  %v520 = vpop.f32.mrb[0].mxu0
  %521 = vmatprep.mubr.bf16.mxu0 0
  %522 = vmatmul.mubr.bf16.gmra.mrb[0].mxu0 %v479
  %v523 = vpop.f32.mrb[0].mxu0
  %v524 = vadd.f32 %v469, %v523
  %v525 = vpop.f32.mrb[0].mxu0
  %v526 = vpop.f32.mrb[0].mxu0
  %v527 = vadd.f32 %v472, %v526
  %v528 = vpop.f32.mrb[0].mxu0
  %529 = vdwg.mxu0
  %v530 = vadd.f32 %v516, %v98
  %v531 = vadd.f32 %v519, %v101
  %v532 = vadd.f32 %v524, %v106
  %v533 = vadd.f32 %v527, %v109
  %v534 = vmax.f32 %v530, 0.0
  %v535 = vmax.f32 %v531, 0.0
  %v536 = vmax.f32 %v532, 0.0
  %v537 = vmax.f32 %v533, 0.0
  %538 = vst.msk [vmem:[%s8] sm:$0xff] %vm238, %v534
  %539 = vst.msk [vmem:[%s8 + $0x8] sm:$0xff] %vm238, %v535
  %540 = vst.msk [vmem:[%s8 + $0x10] sm:$0xff] %vm238, %v536
  %541 = vst.msk [vmem:[%s8 + $0x18] sm:$0xff] %vm238, %v537
  // Predicated region
  $region34: #{custom_graph_sage_forward.2} parent=0 // pred_check
    _
  $region35: #{custom_graph_sage_forward.2} parent=0 // pred_check_branch
    %543 = sbr.rel (0) target = $region37
  $region36: #{custom_graph_sage_forward.2} parent=0 // pred_region
    _
  $region37: #{custom_graph_sage_forward.2} parent=0 // pred_fallthru
    _
  // Predicated region
  $region38: #{custom_graph_sage_forward.2} parent=0 // pred_check
    _
  $region39: #{custom_graph_sage_forward.2} parent=0 // pred_check_branch
    %545 = sbr.rel (0) target = $region41
  $region40: #{custom_graph_sage_forward.2} parent=0 // pred_region
    _
  $region41: #{custom_graph_sage_forward.2} parent=0 // pred_fallthru
    _

// kernel: custom_graph_sage_forward.3
$region0: #{custom_graph_sage_forward.3}
  #allocation0 [shape = 'u32[]', space=smem, size = 0x4, offset = 0x4, fixed_abs, tag = 'smem constant byte address 0x4 - core index']
  #allocation1 [shape = 'u32[144,128]{1,0:T(1,128)}', space=vmem, size = 0x12000, scoped, tag = 'internal scratch']
  #allocation2 [shape = 'f32[64,16]{1,0:T(8,128)}', space=vmem, size = 0x8000, scoped, tag = 'scratch operand']
  #allocation3 [shape = 'f32[64,16]{1,0:T(8,128)}', space=vmem, size = 0x8000, scoped, tag = 'scratch operand']
  #allocation4 [shape = 's32[1]{0}', space=sflag, size = 0x4, scoped, tag = 'scoped memory for custom_graph_sage_forward.3']
  #allocation5 [shape = 'u8[512]{0}', space=smem, size = 0x200, scoped, tag = 'prefetched SMEM operand 0']
  #allocation6 [shape = 'u8[512]{0}', space=smem, size = 0x200, scoped, tag = 'prefetched SMEM operand 1']
  #allocation7 [shape = 'f32[1,1]{1,0:T(1,128)S(1)}', space=vmem, size = 0x200, scoped, tag = 'scoped memory for custom_graph_sage_forward.3']
  %s0 = inlined_call_operand.vmem [shape: s32[64], index: 0, kind: input, shape index: {}]
  %s1 = inlined_call_operand.vmem [shape: s32[64], index: 1, kind: input, shape index: {}]
  %s2 = inlined_call_operand.vmem [shape: f32[32,16], index: 2, kind: input, shape index: {}]
  %s3 = inlined_call_operand.vmem [shape: bf16[64,8], index: 3, kind: input, shape index: {}]
  %s4 = inlined_call_operand.vmem [shape: bf16[16,256], index: 4, kind: input, shape index: {}]
  %s5 = inlined_call_operand.vmem [shape: bf16[16,256], index: 5, kind: input, shape index: {}]
  %s6 = inlined_call_operand.vmem [shape: bf16[8,256], index: 6, kind: input, shape index: {}]
  %s7 = inlined_call_operand.vmem [shape: f32[1,256], index: 7, kind: input, shape index: {}]
  %s8 = inlined_call_operand.vmem [shape: bf16[256,128], index: 8, kind: input, shape index: {}]
  %s9 = inlined_call_operand.vmem [shape: f32[1,128], index: 9, kind: input, shape index: {}]
  %s10 = inlined_call_operand.vmem [shape: bf16[128,64], index: 10, kind: input, shape index: {}]
  %s11 = inlined_call_operand.vmem [shape: f32[1,64], index: 11, kind: input, shape index: {}]
  %s12 = inlined_call_operand.vmem [shape: f32[1,64], index: 12, kind: input, shape index: {}]
  %s13 = inlined_call_operand.<no memory space> [shape: f32[1,1], index: 13, kind: input, shape index: {}]
  %s14 = inlined_call_operand.vmem [shape: f32[64,1], index: 14, kind: output, shape index: {}]
  %s15 = sld [smem:[#allocation0]]
  $region65: #{custom_graph_sage_forward.3} parent=0
    _
  %s17 = ssub.s32 1, %s15
  %s18 = scalar_select 0, %s17, %s15
  %s19 = sshll.u32 %s0, 4
  %s20 = int_to_ptr.vmem [resolvable:$true] %s19
  %22 = dma.vmem_to_smem %s20, 16, [#allocation5], [#allocation4]
  %s23 = sshll.u32 %s1, 4
  %s24 = int_to_ptr.vmem [resolvable:$true] %s23
  %26 = dma.vmem_to_smem %s24, 16, [#allocation6], [#allocation4]
  %v27 = vstv %s13
  %28 = vst [vmem:[#allocation7] sm:$0x1] %v27
  %29 = dma.done [#allocation4], 32
  %30 = sfence
  // Predicated region
  $region2: #{custom_graph_sage_forward.3} parent=0 // pred_check
    _
  $region3: #{custom_graph_sage_forward.3} parent=0 // pred_check_branch
    %32 = sbr.rel (0) target = $region5
  $region4: #{custom_graph_sage_forward.3} parent=0 // pred_region
    _
  $region5: #{custom_graph_sage_forward.3} parent=0 // pred_fallthru
    _
  // Predicated region
  $region6: #{custom_graph_sage_forward.3} parent=0 // pred_check
    _
  $region7: #{custom_graph_sage_forward.3} parent=0 // pred_check_branch
    %34 = sbr.rel (0) target = $region9
  $region8: #{custom_graph_sage_forward.3} parent=0 // pred_region
    _
  $region9: #{custom_graph_sage_forward.3} parent=0 // pred_fallthru
    _
  // Predicated region
  $region10: #{custom_graph_sage_forward.3} parent=0 // pred_check
    _
  $region11: #{custom_graph_sage_forward.3} parent=0 // pred_check_branch
    %36 = sbr.rel (0) target = $region13
  $region12: #{custom_graph_sage_forward.3} parent=0 // pred_region
    _
  $region13: #{custom_graph_sage_forward.3} parent=0 // pred_fallthru
    _
  // Predicated region
  $region14: #{custom_graph_sage_forward.3} parent=0 // pred_check
    _
  $region15: #{custom_graph_sage_forward.3} parent=0 // pred_check_branch
    %38 = sbr.rel (0) target = $region17
  $region16: #{custom_graph_sage_forward.3} parent=0 // pred_region
    _
  $region17: #{custom_graph_sage_forward.3} parent=0 // pred_fallthru
    _
  // Predicated region
  $region18: #{custom_graph_sage_forward.3} parent=0 // pred_check
    _
  $region19: #{custom_graph_sage_forward.3} parent=0 // pred_check_branch
    %40 = sbr.rel (0) target = $region21
  $region20: #{custom_graph_sage_forward.3} parent=0 // pred_region
    _
  $region21: #{custom_graph_sage_forward.3} parent=0 // pred_fallthru
    _
  // Predicated region
  $region22: #{custom_graph_sage_forward.3} parent=0 // pred_check
    _
  $region23: #{custom_graph_sage_forward.3} parent=0 // pred_check_branch
    %42 = sbr.rel (0) target = $region25
  $region24: #{custom_graph_sage_forward.3} parent=0 // pred_region
    _
  $region25: #{custom_graph_sage_forward.3} parent=0 // pred_fallthru
    _
  // Predicated region
  $region26: #{custom_graph_sage_forward.3} parent=0 // pred_check
    _
  $region27: #{custom_graph_sage_forward.3} parent=0 // pred_check_branch
    %44 = sbr.rel (0) target = $region29
  $region28: #{custom_graph_sage_forward.3} parent=0 // pred_region
    _
  $region29: #{custom_graph_sage_forward.3} parent=0 // pred_fallthru
    _
  // Predicated region
  $region30: #{custom_graph_sage_forward.3} parent=0 // pred_check
    _
  $region31: #{custom_graph_sage_forward.3} parent=0 // pred_check_branch
    %46 = sbr.rel (0) target = $region33
  $region32: #{custom_graph_sage_forward.3} parent=0 // pred_region
    _
  $region33: #{custom_graph_sage_forward.3} parent=0 // pred_fallthru
    _
  // Predicated region
  $region34: #{custom_graph_sage_forward.3} parent=0 // pred_check
    _
  $region35: #{custom_graph_sage_forward.3} parent=0 // pred_check_branch
    %48 = sbr.rel (0) target = $region37
  $region36: #{custom_graph_sage_forward.3} parent=0 // pred_region
    _
  $region37: #{custom_graph_sage_forward.3} parent=0 // pred_fallthru
    _
  // Predicated region
  $region38: #{custom_graph_sage_forward.3} parent=0 // pred_check
    _
  $region39: #{custom_graph_sage_forward.3} parent=0 // pred_check_branch
    %50 = sbr.rel (0) target = $region41
  $region40: #{custom_graph_sage_forward.3} parent=0 // pred_region
    _
  $region41: #{custom_graph_sage_forward.3} parent=0 // pred_fallthru
    _
  // Predicated region
  $region42: #{custom_graph_sage_forward.3} parent=0 // pred_check
    _
  $region43: #{custom_graph_sage_forward.3} parent=0 // pred_check_branch
    %52 = sbr.rel (0) target = $region45
  $region44: #{custom_graph_sage_forward.3} parent=0 // pred_region
    _
  $region45: #{custom_graph_sage_forward.3} parent=0 // pred_fallthru
    _
  // Predicated region
  $region46: #{custom_graph_sage_forward.3} parent=0 // pred_check
    _
  $region47: #{custom_graph_sage_forward.3} parent=0 // pred_check_branch
    %54 = sbr.rel (0) target = $region49
  $region48: #{custom_graph_sage_forward.3} parent=0 // pred_region
    _
  $region49: #{custom_graph_sage_forward.3} parent=0 // pred_fallthru
    _
  %s56 = smul.u32 0, 64
  loop: start=0, step=1, limit=64
  $region50: #{custom_graph_sage_forward.3} parent=0 // loop_pre_header
    _
  $region51: #{custom_graph_sage_forward.3} parent=0 // loop_header
    %s58 = sphi 0, %s62
    %p59 = scmp.ge.s32.totalorder %s58, 64
  $region52: #{custom_graph_sage_forward.3} parent=0 // loop_header_branch
    %61 = sbr.rel (%p59) target = $region56
  $region53: #{custom_graph_sage_forward.3} parent=0 // loop_body
    %s63 = sadd.s32 %s56, %s58
    %s64 = sld [smem:[#allocation5 + %s63]]
    %s65 = sld [smem:[#allocation6 + %s63]]
    %s66 = scalar_lea.vmem %s2, %s64
    %v67 = vld [vmem:[%s66] sm:$0x1]
    %s68 = scalar_lea.vmem [#allocation2], %s58
    %vm69 = vcmask 122880
    %70 = vst.msk [vmem:[%s68] sm:$0x1] %vm69, %v67
    %s71 = scalar_lea.vmem %s2, %s65
    %v72 = vld [vmem:[%s71] sm:$0x1]
    %s73 = scalar_lea.vmem [#allocation3], %s58
    %74 = vst.msk [vmem:[%s73] sm:$0x1] %vm69, %v72
  $region54: #{custom_graph_sage_forward.3} parent=0 // loop_footer
    %s62 = sadd.s32 1, %s58
  $region55: #{custom_graph_sage_forward.3} parent=0 // loop_footer_branch
    %57 = sbr.rel target = $region51
  $region56: #{custom_graph_sage_forward.3} parent=0 // loop_exit
    _
  %v75 = vld [vmem:[#allocation2] sm:$0xff]
  %v76 = vld [vmem:[#allocation2 + $0x8] sm:$0xff]
  %v77 = vld [vmem:[#allocation2 + $0x10] sm:$0xff]
  %v78 = vld [vmem:[#allocation2 + $0x18] sm:$0xff]
  %v79 = vld [vmem:[#allocation2 + $0x20] sm:$0xff]
  %v80 = vld [vmem:[#allocation2 + $0x28] sm:$0xff]
  %v81 = vld [vmem:[#allocation2 + $0x30] sm:$0xff]
  %v82 = vld [vmem:[#allocation2 + $0x38] sm:$0xff]
  %v83 = vpack.c.bf16 %v76, %v75
  %v84 = vpack.c.bf16 %v78, %v77
  %v85 = vpack.c.bf16 %v80, %v79
  %v86 = vpack.c.bf16 %v82, %v81
  %v87 = vld [vmem:[%s4] sm:$0xff]
  %v88 = vld [vmem:[%s4 + $0x8] sm:$0xff]
  %v89 = vld [vmem:[#allocation3] sm:$0xff]
  %v90 = vld [vmem:[#allocation3 + $0x8] sm:$0xff]
  %v91 = vld [vmem:[#allocation3 + $0x10] sm:$0xff]
  %v92 = vld [vmem:[#allocation3 + $0x18] sm:$0xff]
  %v93 = vld [vmem:[#allocation3 + $0x20] sm:$0xff]
  %v94 = vld [vmem:[#allocation3 + $0x28] sm:$0xff]
  %v95 = vld [vmem:[#allocation3 + $0x30] sm:$0xff]
  %v96 = vld [vmem:[#allocation3 + $0x38] sm:$0xff]
  %v97 = vpack.c.bf16 %v90, %v89
  %v98 = vpack.c.bf16 %v92, %v91
  %v99 = vpack.c.bf16 %v94, %v93
  %v100 = vpack.c.bf16 %v96, %v95
  %v101 = vld [vmem:[%s5] sm:$0xff]
  %v102 = vld [vmem:[%s5 + $0x8] sm:$0xff]
  %v105 = vunpack.c.l.b16 %v101
  %v106 = vunpack.c.h.b16 %v101
  %v107 = vunpack.c.l.b16 %v102
  %v108 = vunpack.c.h.b16 %v102
  %v109 = vpack.c.b16 %v107, %v105
  %v110 = vpack.c.b16 %v108, %v106
  %vm113 = vcmask 130048
  %v115 = vsel %vm113, %v97, 0
  %v118 = vsel %vm113, %v98, 0
  %v121 = vsel %vm113, %v99, 0
  %v124 = vsel %vm113, %v100, 0
  %126 = vmatprep.subr.bf16.mxu0 %v110
  %127 = vmatpush1.bf16.msra.mxu0 %v109
  %128 = vmatprep.subr.bf16.mxu0 0
  %129 = vmatpush1.bf16.msra.mxu0 0
  %130 = vmatprep.subr.bf16.mxu0 0
  %131 = vmatpush1.bf16.msra.mxu0 0
  %132 = vmatprep.subr.bf16.mxu0 0
  %133 = vmatpush1.bf16.msra.mxu0 0
  %134 = vmatprep.subr.bf16.mxu0 0
  %135 = vmatpush1.bf16.msra.mxu0 0
  %136 = vmatprep.subr.bf16.mxu0 0
  %137 = vmatpush1.bf16.msra.mxu0 0
  %138 = vmatprep.subr.bf16.mxu0 0
  %139 = vmatpush1.bf16.msra.mxu0 0
  %140 = vmatprep.subr.bf16.mxu0 0
  %141 = vmatpush1.bf16.msra.mxu0 0
  %142 = vmatprep.subr.bf16.mxu0 0
  %143 = vmatpush1.bf16.msra.mxu0 0
  %144 = vmatprep.subr.bf16.mxu0 0
  %145 = vmatpush1.bf16.msra.mxu0 0
  %146 = vmatprep.subr.bf16.mxu0 0
  %147 = vmatpush1.bf16.msra.mxu0 0
  %148 = vmatprep.subr.bf16.mxu0 0
  %149 = vmatpush1.bf16.msra.mxu0 0
  %150 = vmatprep.subr.bf16.mxu0 0
  %151 = vmatpush1.bf16.msra.mxu0 0
  %152 = vmatprep.subr.bf16.mxu0 0
  %153 = vmatpush1.bf16.msra.mxu0 0
  %154 = vmatprep.subr.bf16.mxu0 0
  %155 = vmatpush1.bf16.msra.mxu0 0
  %156 = vmatprep.subr.bf16.mxu0 0
  %157 = vmatpush1.bf16.msra.mxu0 0
  %158 = vmatprep.mubr.bf16.mxu0 0
  %159 = vmatmul.mubr.bf16.gmra.mrb[0].mxu0 %v115
  %v160 = vpop.f32.mrb[0].mxu0
  %v161 = vadd.f32 0.0, %v160
  %v162 = vpop.f32.mrb[0].mxu0
  %v163 = vadd.f32 0.0, %v162
  %v164 = vpop.f32.mrb[0].mxu0
  %v165 = vadd.f32 0.0, %v164
  %v166 = vpop.f32.mrb[0].mxu0
  %v167 = vadd.f32 0.0, %v166
  %168 = vmatprep.mubr.bf16.mxu0 0
  %169 = vmatmul.mubr.bf16.gmra.mrb[0].mxu0 %v118
  %v170 = vpop.f32.mrb[0].mxu0
  %v171 = vadd.f32 0.0, %v170
  %v172 = vpop.f32.mrb[0].mxu0
  %v173 = vadd.f32 0.0, %v172
  %v174 = vpop.f32.mrb[0].mxu0
  %v175 = vadd.f32 0.0, %v174
  %v176 = vpop.f32.mrb[0].mxu0
  %v177 = vadd.f32 0.0, %v176
  %178 = vmatprep.mubr.bf16.mxu0 0
  %179 = vmatmul.mubr.bf16.gmra.mrb[0].mxu0 %v121
  %v180 = vpop.f32.mrb[0].mxu0
  %v181 = vadd.f32 0.0, %v180
  %v182 = vpop.f32.mrb[0].mxu0
  %v183 = vadd.f32 0.0, %v182
  %v184 = vpop.f32.mrb[0].mxu0
  %v185 = vadd.f32 0.0, %v184
  %v186 = vpop.f32.mrb[0].mxu0
  %v187 = vadd.f32 0.0, %v186
  %188 = vmatprep.mubr.bf16.mxu0 0
  %189 = vmatmul.mubr.bf16.gmra.mrb[0].mxu0 %v124
  %v190 = vpop.f32.mrb[0].mxu0
  %v191 = vadd.f32 0.0, %v190
  %v192 = vpop.f32.mrb[0].mxu0
  %v193 = vadd.f32 0.0, %v192
  %v194 = vpop.f32.mrb[0].mxu0
  %v195 = vadd.f32 0.0, %v194
  %v196 = vpop.f32.mrb[0].mxu0
  %v197 = vadd.f32 0.0, %v196
  %198 = vdwg.mxu0
  %v201 = vunpack.c.l.b16 %v87
  %v202 = vunpack.c.h.b16 %v87
  %v203 = vunpack.c.l.b16 %v88
  %v204 = vunpack.c.h.b16 %v88
  %v205 = vpack.c.b16 %v203, %v201
  %v206 = vpack.c.b16 %v204, %v202
  %v210 = vsel %vm113, %v83, 0
  %v213 = vsel %vm113, %v84, 0
  %v216 = vsel %vm113, %v85, 0
  %v219 = vsel %vm113, %v86, 0
  %221 = vmatprep.subr.bf16.mxu0 %v206
  %222 = vmatpush1.bf16.msra.mxu0 %v205
  %223 = vmatprep.subr.bf16.mxu0 0
  %224 = vmatpush1.bf16.msra.mxu0 0
  %225 = vmatprep.subr.bf16.mxu0 0
  %226 = vmatpush1.bf16.msra.mxu0 0
  %227 = vmatprep.subr.bf16.mxu0 0
  %228 = vmatpush1.bf16.msra.mxu0 0
  %229 = vmatprep.subr.bf16.mxu0 0
  %230 = vmatpush1.bf16.msra.mxu0 0
  %231 = vmatprep.subr.bf16.mxu0 0
  %232 = vmatpush1.bf16.msra.mxu0 0
  %233 = vmatprep.subr.bf16.mxu0 0
  %234 = vmatpush1.bf16.msra.mxu0 0
  %235 = vmatprep.subr.bf16.mxu0 0
  %236 = vmatpush1.bf16.msra.mxu0 0
  %237 = vmatprep.subr.bf16.mxu0 0
  %238 = vmatpush1.bf16.msra.mxu0 0
  %239 = vmatprep.subr.bf16.mxu0 0
  %240 = vmatpush1.bf16.msra.mxu0 0
  %241 = vmatprep.subr.bf16.mxu0 0
  %242 = vmatpush1.bf16.msra.mxu0 0
  %243 = vmatprep.subr.bf16.mxu0 0
  %244 = vmatpush1.bf16.msra.mxu0 0
  %245 = vmatprep.subr.bf16.mxu0 0
  %246 = vmatpush1.bf16.msra.mxu0 0
  %247 = vmatprep.subr.bf16.mxu0 0
  %248 = vmatpush1.bf16.msra.mxu0 0
  %249 = vmatprep.subr.bf16.mxu0 0
  %250 = vmatpush1.bf16.msra.mxu0 0
  %251 = vmatprep.subr.bf16.mxu0 0
  %252 = vmatpush1.bf16.msra.mxu0 0
  %253 = vmatprep.mubr.bf16.mxu0 0
  %254 = vmatmul.mubr.bf16.gmra.mrb[0].mxu0 %v210
  %v255 = vpop.f32.mrb[0].mxu0
  %v256 = vadd.f32 %v161, %v255
  %v257 = vpop.f32.mrb[0].mxu0
  %v258 = vadd.f32 %v163, %v257
  %v259 = vpop.f32.mrb[0].mxu0
  %v260 = vadd.f32 %v165, %v259
  %v261 = vpop.f32.mrb[0].mxu0
  %v262 = vadd.f32 %v167, %v261
  %263 = vmatprep.mubr.bf16.mxu0 0
  %264 = vmatmul.mubr.bf16.gmra.mrb[0].mxu0 %v213
  %v265 = vpop.f32.mrb[0].mxu0
  %v266 = vadd.f32 %v171, %v265
  %v267 = vpop.f32.mrb[0].mxu0
  %v268 = vadd.f32 %v173, %v267
  %v269 = vpop.f32.mrb[0].mxu0
  %v270 = vadd.f32 %v175, %v269
  %v271 = vpop.f32.mrb[0].mxu0
  %v272 = vadd.f32 %v177, %v271
  %273 = vmatprep.mubr.bf16.mxu0 0
  %274 = vmatmul.mubr.bf16.gmra.mrb[0].mxu0 %v216
  %v275 = vpop.f32.mrb[0].mxu0
  %v276 = vadd.f32 %v181, %v275
  %v277 = vpop.f32.mrb[0].mxu0
  %v278 = vadd.f32 %v183, %v277
  %v279 = vpop.f32.mrb[0].mxu0
  %v280 = vadd.f32 %v185, %v279
  %v281 = vpop.f32.mrb[0].mxu0
  %v282 = vadd.f32 %v187, %v281
  %283 = vmatprep.mubr.bf16.mxu0 0
  %284 = vmatmul.mubr.bf16.gmra.mrb[0].mxu0 %v219
  %v285 = vpop.f32.mrb[0].mxu0
  %v286 = vadd.f32 %v191, %v285
  %v287 = vpop.f32.mrb[0].mxu0
  %v288 = vadd.f32 %v193, %v287
  %v289 = vpop.f32.mrb[0].mxu0
  %v290 = vadd.f32 %v195, %v289
  %v291 = vpop.f32.mrb[0].mxu0
  %v292 = vadd.f32 %v197, %v291
  %293 = vdwg.mxu0
  %v294 = vld [vmem:[%s3] sm:$0xf]
  %v295 = vld [vmem:[%s3 + $0x4] sm:$0xf]
  %v296 = vld [vmem:[%s3 + $0x8] sm:$0xf]
  %v297 = vld [vmem:[%s3 + $0xc] sm:$0xf]
  %v298 = vld [vmem:[%s3 + $0x10] sm:$0xf]
  %v299 = vld [vmem:[%s3 + $0x14] sm:$0xf]
  %v300 = vld [vmem:[%s3 + $0x18] sm:$0xf]
  %v301 = vld [vmem:[%s3 + $0x1c] sm:$0xf]
  %v302 = vld [vmem:[%s6] sm:$0xff]
  %v311 = vunpack.c.l.b16 %v294
  %v312 = vunpack.c.l.b16 %v295
  %v313 = vunpack.c.l.b16 %v296
  %v314 = vunpack.c.l.b16 %v297
  %v315 = vunpack.c.l.b16 %v298
  %v316 = vunpack.c.l.b16 %v299
  %v317 = vunpack.c.l.b16 %v300
  %v318 = vunpack.c.l.b16 %v301
  %v319 = vpack.c.b16 %v312, %v311
  %v320 = vpack.c.b16 %v314, %v313
  %v321 = vpack.c.b16 %v316, %v315
  %v322 = vpack.c.b16 %v318, %v317
  %v324 = vunpack.c.l.b16 %v302
  %v325 = vunpack.c.h.b16 %v302
  %v326 = vpack.c.b16 %v324, %v324
  %v327 = vpack.c.b16 %v325, %v325
  %vm328 = vcmask 64512
  %v330 = vsel %vm328, %v319, 0
  %v333 = vsel %vm328, %v320, 0
  %v336 = vsel %vm328, %v321, 0
  %v339 = vsel %vm328, %v322, 0
  %vm341 = vcmask 1043456
  %v343 = vsel %vm341, %v326, 0
  %v346 = vsel %vm341, %v327, 0
  %348 = vmatprep.subr.bf16.mxu0 %v346
  %349 = vmatpush1.bf16.msra.mxu0 %v343
  %350 = vmatprep.subr.bf16.mxu0 0
  %351 = vmatpush1.bf16.msra.mxu0 0
  %352 = vmatprep.subr.bf16.mxu0 0
  %353 = vmatpush1.bf16.msra.mxu0 0
  %354 = vmatprep.subr.bf16.mxu0 0
  %355 = vmatpush1.bf16.msra.mxu0 0
  %356 = vmatprep.subr.bf16.mxu0 0
  %357 = vmatpush1.bf16.msra.mxu0 0
  %358 = vmatprep.subr.bf16.mxu0 0
  %359 = vmatpush1.bf16.msra.mxu0 0
  %360 = vmatprep.subr.bf16.mxu0 0
  %361 = vmatpush1.bf16.msra.mxu0 0
  %362 = vmatprep.subr.bf16.mxu0 0
  %363 = vmatpush1.bf16.msra.mxu0 0
  %364 = vmatprep.subr.bf16.mxu0 0
  %365 = vmatpush1.bf16.msra.mxu0 0
  %366 = vmatprep.subr.bf16.mxu0 0
  %367 = vmatpush1.bf16.msra.mxu0 0
  %368 = vmatprep.subr.bf16.mxu0 0
  %369 = vmatpush1.bf16.msra.mxu0 0
  %370 = vmatprep.subr.bf16.mxu0 0
  %371 = vmatpush1.bf16.msra.mxu0 0
  %372 = vmatprep.subr.bf16.mxu0 0
  %373 = vmatpush1.bf16.msra.mxu0 0
  %374 = vmatprep.subr.bf16.mxu0 0
  %375 = vmatpush1.bf16.msra.mxu0 0
  %376 = vmatprep.subr.bf16.mxu0 0
  %377 = vmatpush1.bf16.msra.mxu0 0
  %378 = vmatprep.subr.bf16.mxu0 0
  %379 = vmatpush1.bf16.msra.mxu0 0
  %380 = vmatprep.mubr.bf16.mxu0 0
  %381 = vmatmul.mubr.bf16.gmra.mrb[0].mxu0 %v330
  %v382 = vpop.f32.mrb[0].mxu0
  %v383 = vadd.f32 0.0, %v382
  %v384 = vpop.f32.mrb[0].mxu0
  %v385 = vadd.f32 0.0, %v384
  %v386 = vpop.f32.mrb[0].mxu0
  %v387 = vadd.f32 0.0, %v386
  %v388 = vpop.f32.mrb[0].mxu0
  %v389 = vadd.f32 0.0, %v388
  %390 = vmatprep.mubr.bf16.mxu0 0
  %391 = vmatmul.mubr.bf16.gmra.mrb[0].mxu0 %v333
  %v392 = vpop.f32.mrb[0].mxu0
  %v393 = vadd.f32 0.0, %v392
  %v394 = vpop.f32.mrb[0].mxu0
  %v395 = vadd.f32 0.0, %v394
  %v396 = vpop.f32.mrb[0].mxu0
  %v397 = vadd.f32 0.0, %v396
  %v398 = vpop.f32.mrb[0].mxu0
  %v399 = vadd.f32 0.0, %v398
  %400 = vmatprep.mubr.bf16.mxu0 0
  %401 = vmatmul.mubr.bf16.gmra.mrb[0].mxu0 %v336
  %v402 = vpop.f32.mrb[0].mxu0
  %v403 = vadd.f32 0.0, %v402
  %v404 = vpop.f32.mrb[0].mxu0
  %v405 = vadd.f32 0.0, %v404
  %v406 = vpop.f32.mrb[0].mxu0
  %v407 = vadd.f32 0.0, %v406
  %v408 = vpop.f32.mrb[0].mxu0
  %v409 = vadd.f32 0.0, %v408
  %410 = vmatprep.mubr.bf16.mxu0 0
  %411 = vmatmul.mubr.bf16.gmra.mrb[0].mxu0 %v339
  %v412 = vpop.f32.mrb[0].mxu0
  %v413 = vadd.f32 0.0, %v412
  %v414 = vpop.f32.mrb[0].mxu0
  %v415 = vadd.f32 0.0, %v414
  %v416 = vpop.f32.mrb[0].mxu0
  %v417 = vadd.f32 0.0, %v416
  %v418 = vpop.f32.mrb[0].mxu0
  %v419 = vadd.f32 0.0, %v418
  %420 = vdwg.mxu0
  %v421 = vadd.f32 %v256, %v383
  %v422 = vadd.f32 %v258, %v385
  %v423 = vadd.f32 %v260, %v387
  %v424 = vadd.f32 %v262, %v389
  %v425 = vadd.f32 %v266, %v393
  %v426 = vadd.f32 %v268, %v395
  %v427 = vadd.f32 %v270, %v397
  %v428 = vadd.f32 %v272, %v399
  %v429 = vadd.f32 %v276, %v403
  %v430 = vadd.f32 %v278, %v405
  %v431 = vadd.f32 %v280, %v407
  %v432 = vadd.f32 %v282, %v409
  %v433 = vadd.f32 %v286, %v413
  %v434 = vadd.f32 %v288, %v415
  %v435 = vadd.f32 %v290, %v417
  %v436 = vadd.f32 %v292, %v419
  %v437 = vld [vmem:[%s7] sm:$0x3]
  %v439 = vlaneseq
  %v440 = vshrl.u32 %v439, 7
  %v441 = vsub.s32 0, %v440
  %v442 = vrot.slane %v437, %v441
  %v443 = vlaneseq
  %v444 = vshrl.u32 %v443, 7
  %v445 = vsub.s32 1, %v444
  %v446 = vrot.slane %v437, %v445
  %v449 = vadd.f32 %v421, %v442
  %v450 = vadd.f32 %v422, %v446
  %v451 = vadd.f32 %v423, %v442
  %v452 = vadd.f32 %v424, %v446
  %v453 = vadd.f32 %v425, %v442
  %v454 = vadd.f32 %v426, %v446
  %v455 = vadd.f32 %v427, %v442
  %v456 = vadd.f32 %v428, %v446
  %v457 = vadd.f32 %v429, %v442
  %v458 = vadd.f32 %v430, %v446
  %v459 = vadd.f32 %v431, %v442
  %v460 = vadd.f32 %v432, %v446
  %v461 = vadd.f32 %v433, %v442
  %v462 = vadd.f32 %v434, %v446
  %v463 = vadd.f32 %v435, %v442
  %v464 = vadd.f32 %v436, %v446
  %v465 = vmax.f32 %v449, 0.0
  %v466 = vmax.f32 %v450, 0.0
  %v467 = vmax.f32 %v451, 0.0
  %v468 = vmax.f32 %v452, 0.0
  %v469 = vmax.f32 %v453, 0.0
  %v470 = vmax.f32 %v454, 0.0
  %v471 = vmax.f32 %v455, 0.0
  %v472 = vmax.f32 %v456, 0.0
  %v473 = vmax.f32 %v457, 0.0
  %v474 = vmax.f32 %v458, 0.0
  %v475 = vmax.f32 %v459, 0.0
  %v476 = vmax.f32 %v460, 0.0
  %v477 = vmax.f32 %v461, 0.0
  %v478 = vmax.f32 %v462, 0.0
  %v479 = vmax.f32 %v463, 0.0
  %v480 = vmax.f32 %v464, 0.0
  %v481 = vpack.c.bf16 %v467, %v465
  %v482 = vpack.c.bf16 %v468, %v466
  %v483 = vpack.c.bf16 %v471, %v469
  %v484 = vpack.c.bf16 %v472, %v470
  %v485 = vpack.c.bf16 %v475, %v473
  %v486 = vpack.c.bf16 %v476, %v474
  %v487 = vpack.c.bf16 %v479, %v477
  %v488 = vpack.c.bf16 %v480, %v478
  %v489 = vld [vmem:[%s8] sm:$0xf]
  %v490 = vld [vmem:[%s8 + $0x4] sm:$0xf]
  %v491 = vld [vmem:[%s8 + $0x8] sm:$0xf]
  %v492 = vld [vmem:[%s8 + $0xc] sm:$0xf]
  %v493 = vld [vmem:[%s8 + $0x10] sm:$0xf]
  %v494 = vld [vmem:[%s8 + $0x14] sm:$0xf]
  %v495 = vld [vmem:[%s8 + $0x18] sm:$0xf]
  %v496 = vld [vmem:[%s8 + $0x1c] sm:$0xf]
  %v497 = vld [vmem:[%s8 + $0x20] sm:$0xf]
  %v498 = vld [vmem:[%s8 + $0x24] sm:$0xf]
  %v499 = vld [vmem:[%s8 + $0x28] sm:$0xf]
  %v500 = vld [vmem:[%s8 + $0x2c] sm:$0xf]
  %v501 = vld [vmem:[%s8 + $0x30] sm:$0xf]
  %v502 = vld [vmem:[%s8 + $0x34] sm:$0xf]
  %v503 = vld [vmem:[%s8 + $0x38] sm:$0xf]
  %v504 = vld [vmem:[%s8 + $0x3c] sm:$0xf]
  %v505 = vld [vmem:[%s8 + $0x40] sm:$0xf]
  %v506 = vld [vmem:[%s8 + $0x44] sm:$0xf]
  %v507 = vld [vmem:[%s8 + $0x48] sm:$0xf]
  %v508 = vld [vmem:[%s8 + $0x4c] sm:$0xf]
  %v509 = vld [vmem:[%s8 + $0x50] sm:$0xf]
  %v510 = vld [vmem:[%s8 + $0x54] sm:$0xf]
  %v511 = vld [vmem:[%s8 + $0x58] sm:$0xf]
  %v512 = vld [vmem:[%s8 + $0x5c] sm:$0xf]
  %v513 = vld [vmem:[%s8 + $0x60] sm:$0xf]
  %v514 = vld [vmem:[%s8 + $0x64] sm:$0xf]
  %v515 = vld [vmem:[%s8 + $0x68] sm:$0xf]
  %v516 = vld [vmem:[%s8 + $0x6c] sm:$0xf]
  %v517 = vld [vmem:[%s8 + $0x70] sm:$0xf]
  %v518 = vld [vmem:[%s8 + $0x74] sm:$0xf]
  %v519 = vld [vmem:[%s8 + $0x78] sm:$0xf]
  %v520 = vld [vmem:[%s8 + $0x7c] sm:$0xf]
  %v521 = vld [vmem:[%s9] sm:$0x1]
  %v523 = vlaneseq
  %v524 = vshrl.u32 %v523, 7
  %v525 = vsub.s32 0, %v524
  %v526 = vrot.slane %v521, %v525
  %v560 = vunpack.c.l.b16 %v489
  %v561 = vunpack.c.l.b16 %v490
  %v562 = vunpack.c.l.b16 %v491
  %v563 = vunpack.c.l.b16 %v492
  %v564 = vunpack.c.l.b16 %v493
  %v565 = vunpack.c.l.b16 %v494
  %v566 = vunpack.c.l.b16 %v495
  %v567 = vunpack.c.l.b16 %v496
  %v568 = vunpack.c.l.b16 %v497
  %v569 = vunpack.c.l.b16 %v498
  %v570 = vunpack.c.l.b16 %v499
  %v571 = vunpack.c.l.b16 %v500
  %v572 = vunpack.c.l.b16 %v501
  %v573 = vunpack.c.l.b16 %v502
  %v574 = vunpack.c.l.b16 %v503
  %v575 = vunpack.c.l.b16 %v504
  %v576 = vunpack.c.l.b16 %v505
  %v577 = vunpack.c.l.b16 %v506
  %v578 = vunpack.c.l.b16 %v507
  %v579 = vunpack.c.l.b16 %v508
  %v580 = vunpack.c.l.b16 %v509
  %v581 = vunpack.c.l.b16 %v510
  %v582 = vunpack.c.l.b16 %v511
  %v583 = vunpack.c.l.b16 %v512
  %v584 = vunpack.c.l.b16 %v513
  %v585 = vunpack.c.l.b16 %v514
  %v586 = vunpack.c.l.b16 %v515
  %v587 = vunpack.c.l.b16 %v516
  %v588 = vunpack.c.l.b16 %v517
  %v589 = vunpack.c.l.b16 %v518
  %v590 = vunpack.c.l.b16 %v519
  %v591 = vunpack.c.l.b16 %v520
  %v592 = vpack.c.b16 %v561, %v560
  %v593 = vpack.c.b16 %v563, %v562
  %v594 = vpack.c.b16 %v565, %v564
  %v595 = vpack.c.b16 %v567, %v566
  %v596 = vpack.c.b16 %v569, %v568
  %v597 = vpack.c.b16 %v571, %v570
  %v598 = vpack.c.b16 %v573, %v572
  %v599 = vpack.c.b16 %v575, %v574
  %v600 = vpack.c.b16 %v577, %v576
  %v601 = vpack.c.b16 %v579, %v578
  %v602 = vpack.c.b16 %v581, %v580
  %v603 = vpack.c.b16 %v583, %v582
  %v604 = vpack.c.b16 %v585, %v584
  %v605 = vpack.c.b16 %v587, %v586
  %v606 = vpack.c.b16 %v589, %v588
  %v607 = vpack.c.b16 %v591, %v590
  %624 = vmatprep.subr.bf16.mxu0 0
  %625 = vmatpush1.bf16.msra.mxu0 %v592
  %626 = vmatprep.subr.bf16.mxu0 0
  %627 = vmatpush1.bf16.msra.mxu0 %v593
  %628 = vmatprep.subr.bf16.mxu0 0
  %629 = vmatpush1.bf16.msra.mxu0 %v594
  %630 = vmatprep.subr.bf16.mxu0 0
  %631 = vmatpush1.bf16.msra.mxu0 %v595
  %632 = vmatprep.subr.bf16.mxu0 0
  %633 = vmatpush1.bf16.msra.mxu0 %v596
  %634 = vmatprep.subr.bf16.mxu0 0
  %635 = vmatpush1.bf16.msra.mxu0 %v597
  %636 = vmatprep.subr.bf16.mxu0 0
  %637 = vmatpush1.bf16.msra.mxu0 %v598
  %638 = vmatprep.subr.bf16.mxu0 0
  %639 = vmatpush1.bf16.msra.mxu0 %v599
  %640 = vmatprep.subr.bf16.mxu0 0
  %641 = vmatpush1.bf16.msra.mxu0 %v600
  %642 = vmatprep.subr.bf16.mxu0 0
  %643 = vmatpush1.bf16.msra.mxu0 %v601
  %644 = vmatprep.subr.bf16.mxu0 0
  %645 = vmatpush1.bf16.msra.mxu0 %v602
  %646 = vmatprep.subr.bf16.mxu0 0
  %647 = vmatpush1.bf16.msra.mxu0 %v603
  %648 = vmatprep.subr.bf16.mxu0 0
  %649 = vmatpush1.bf16.msra.mxu0 %v604
  %650 = vmatprep.subr.bf16.mxu0 0
  %651 = vmatpush1.bf16.msra.mxu0 %v605
  %652 = vmatprep.subr.bf16.mxu0 0
  %653 = vmatpush1.bf16.msra.mxu0 %v606
  %654 = vmatprep.subr.bf16.mxu0 0
  %655 = vmatpush1.bf16.msra.mxu0 %v607
  %656 = vmatprep.mubr.bf16.mxu0 %v482
  %657 = vmatmul.mubr.bf16.gmra.mrb[0].mxu0 %v481
  %v658 = vpop.f32.mrb[0].mxu0
  %v659 = vadd.f32 %v526, %v658
  %v660 = vpop.f32.mrb[0].mxu0
  %v661 = vpop.f32.mrb[0].mxu0
  %v662 = vadd.f32 %v526, %v661
  %v663 = vpop.f32.mrb[0].mxu0
  %664 = vmatprep.mubr.bf16.mxu0 %v484
  %665 = vmatmul.mubr.bf16.gmra.mrb[0].mxu0 %v483
  %v666 = vpop.f32.mrb[0].mxu0
  %v667 = vadd.f32 %v526, %v666
  %v668 = vpop.f32.mrb[0].mxu0
  %v669 = vpop.f32.mrb[0].mxu0
  %v670 = vadd.f32 %v526, %v669
  %v671 = vpop.f32.mrb[0].mxu0
  %672 = vmatprep.mubr.bf16.mxu0 %v486
  %673 = vmatmul.mubr.bf16.gmra.mrb[0].mxu0 %v485
  %v674 = vpop.f32.mrb[0].mxu0
  %v675 = vadd.f32 %v526, %v674
  %v676 = vpop.f32.mrb[0].mxu0
  %v677 = vpop.f32.mrb[0].mxu0
  %v678 = vadd.f32 %v526, %v677
  %v679 = vpop.f32.mrb[0].mxu0
  %680 = vmatprep.mubr.bf16.mxu0 %v488
  %681 = vmatmul.mubr.bf16.gmra.mrb[0].mxu0 %v487
  %v682 = vpop.f32.mrb[0].mxu0
  %v683 = vadd.f32 %v526, %v682
  %v684 = vpop.f32.mrb[0].mxu0
  %v685 = vpop.f32.mrb[0].mxu0
  %v686 = vadd.f32 %v526, %v685
  %v687 = vpop.f32.mrb[0].mxu0
  %688 = vdwg.mxu0
  %v689 = vmax.f32 %v659, 0.0
  %v690 = vmax.f32 %v662, 0.0
  %v691 = vmax.f32 %v667, 0.0
  %v692 = vmax.f32 %v670, 0.0
  %v693 = vmax.f32 %v675, 0.0
  %v694 = vmax.f32 %v678, 0.0
  %v695 = vmax.f32 %v683, 0.0
  %v696 = vmax.f32 %v686, 0.0
  %v697 = vpack.c.bf16 %v690, %v689
  %v698 = vpack.c.bf16 %v692, %v691
  %v699 = vpack.c.bf16 %v694, %v693
  %v700 = vpack.c.bf16 %v696, %v695
  %v701 = vld [vmem:[%s10] sm:$0xf]
  %v702 = vld [vmem:[%s10 + $0x4] sm:$0xf]
  %v703 = vld [vmem:[%s10 + $0x8] sm:$0xf]
  %v704 = vld [vmem:[%s10 + $0xc] sm:$0xf]
  %v705 = vld [vmem:[%s10 + $0x10] sm:$0xf]
  %v706 = vld [vmem:[%s10 + $0x14] sm:$0xf]
  %v707 = vld [vmem:[%s10 + $0x18] sm:$0xf]
  %v708 = vld [vmem:[%s10 + $0x1c] sm:$0xf]
  %v709 = vld [vmem:[%s10 + $0x20] sm:$0xf]
  %v710 = vld [vmem:[%s10 + $0x24] sm:$0xf]
  %v711 = vld [vmem:[%s10 + $0x28] sm:$0xf]
  %v712 = vld [vmem:[%s10 + $0x2c] sm:$0xf]
  %v713 = vld [vmem:[%s10 + $0x30] sm:$0xf]
  %v714 = vld [vmem:[%s10 + $0x34] sm:$0xf]
  %v715 = vld [vmem:[%s10 + $0x38] sm:$0xf]
  %v716 = vld [vmem:[%s10 + $0x3c] sm:$0xf]
  %v717 = vld [vmem:[%s11] sm:$0x1]
  %v719 = vlaneseq
  %v720 = vshrl.u32 %v719, 7
  %v721 = vsub.s32 0, %v720
  %v722 = vrot.slane %v717, %v721
  %v740 = vunpack.c.l.b16 %v701
  %v741 = vunpack.c.l.b16 %v702
  %v742 = vunpack.c.l.b16 %v703
  %v743 = vunpack.c.l.b16 %v704
  %v744 = vunpack.c.l.b16 %v705
  %v745 = vunpack.c.l.b16 %v706
  %v746 = vunpack.c.l.b16 %v707
  %v747 = vunpack.c.l.b16 %v708
  %v748 = vunpack.c.l.b16 %v709
  %v749 = vunpack.c.l.b16 %v710
  %v750 = vunpack.c.l.b16 %v711
  %v751 = vunpack.c.l.b16 %v712
  %v752 = vunpack.c.l.b16 %v713
  %v753 = vunpack.c.l.b16 %v714
  %v754 = vunpack.c.l.b16 %v715
  %v755 = vunpack.c.l.b16 %v716
  %v756 = vpack.c.b16 %v741, %v740
  %v757 = vpack.c.b16 %v743, %v742
  %v758 = vpack.c.b16 %v745, %v744
  %v759 = vpack.c.b16 %v747, %v746
  %v760 = vpack.c.b16 %v749, %v748
  %v761 = vpack.c.b16 %v751, %v750
  %v762 = vpack.c.b16 %v753, %v752
  %v763 = vpack.c.b16 %v755, %v754
  %772 = vmatprep.subr.bf16.mxu0 0
  %773 = vmatpush1.bf16.msra.mxu0 %v756
  %774 = vmatprep.subr.bf16.mxu0 0
  %775 = vmatpush1.bf16.msra.mxu0 %v757
  %776 = vmatprep.subr.bf16.mxu0 0
  %777 = vmatpush1.bf16.msra.mxu0 %v758
  %778 = vmatprep.subr.bf16.mxu0 0
  %779 = vmatpush1.bf16.msra.mxu0 %v759
  %780 = vmatprep.subr.bf16.mxu0 0
  %781 = vmatpush1.bf16.msra.mxu0 %v760
  %782 = vmatprep.subr.bf16.mxu0 0
  %783 = vmatpush1.bf16.msra.mxu0 %v761
  %784 = vmatprep.subr.bf16.mxu0 0
  %785 = vmatpush1.bf16.msra.mxu0 %v762
  %786 = vmatprep.subr.bf16.mxu0 0
  %787 = vmatpush1.bf16.msra.mxu0 %v763
  %788 = vmatprep.subr.bf16.mxu0 0
  %789 = vmatpush1.bf16.msra.mxu0 0
  %790 = vmatprep.subr.bf16.mxu0 0
  %791 = vmatpush1.bf16.msra.mxu0 0
  %792 = vmatprep.subr.bf16.mxu0 0
  %793 = vmatpush1.bf16.msra.mxu0 0
  %794 = vmatprep.subr.bf16.mxu0 0
  %795 = vmatpush1.bf16.msra.mxu0 0
  %796 = vmatprep.subr.bf16.mxu0 0
  %797 = vmatpush1.bf16.msra.mxu0 0
  %798 = vmatprep.subr.bf16.mxu0 0
  %799 = vmatpush1.bf16.msra.mxu0 0
  %800 = vmatprep.subr.bf16.mxu0 0
  %801 = vmatpush1.bf16.msra.mxu0 0
  %802 = vmatprep.subr.bf16.mxu0 0
  %803 = vmatpush1.bf16.msra.mxu0 0
  %804 = vmatprep.mubr.bf16.mxu0 0
  %805 = vmatmul.mubr.bf16.gmra.mrb[0].mxu0 %v697
  %v806 = vpop.f32.mrb[0].mxu0
  %v807 = vadd.f32 %v722, %v806
  %v808 = vpop.f32.mrb[0].mxu0
  %v809 = vpop.f32.mrb[0].mxu0
  %v810 = vadd.f32 %v722, %v809
  %v811 = vpop.f32.mrb[0].mxu0
  %812 = vmatprep.mubr.bf16.mxu0 0
  %813 = vmatmul.mubr.bf16.gmra.mrb[0].mxu0 %v698
  %v814 = vpop.f32.mrb[0].mxu0
  %v815 = vadd.f32 %v722, %v814
  %v816 = vpop.f32.mrb[0].mxu0
  %v817 = vpop.f32.mrb[0].mxu0
  %v818 = vadd.f32 %v722, %v817
  %v819 = vpop.f32.mrb[0].mxu0
  %820 = vmatprep.mubr.bf16.mxu0 0
  %821 = vmatmul.mubr.bf16.gmra.mrb[0].mxu0 %v699
  %v822 = vpop.f32.mrb[0].mxu0
  %v823 = vadd.f32 %v722, %v822
  %v824 = vpop.f32.mrb[0].mxu0
  %v825 = vpop.f32.mrb[0].mxu0
  %v826 = vadd.f32 %v722, %v825
  %v827 = vpop.f32.mrb[0].mxu0
  %828 = vmatprep.mubr.bf16.mxu0 0
  %829 = vmatmul.mubr.bf16.gmra.mrb[0].mxu0 %v700
  %v830 = vpop.f32.mrb[0].mxu0
  %v831 = vadd.f32 %v722, %v830
  %v832 = vpop.f32.mrb[0].mxu0
  %v833 = vpop.f32.mrb[0].mxu0
  %v834 = vadd.f32 %v722, %v833
  %v835 = vpop.f32.mrb[0].mxu0
  %836 = vdwg.mxu0
  %v837 = vmax.f32 %v807, 0.0
  %v838 = vmax.f32 %v810, 0.0
  %v839 = vmax.f32 %v815, 0.0
  %v840 = vmax.f32 %v818, 0.0
  %v841 = vmax.f32 %v823, 0.0
  %v842 = vmax.f32 %v826, 0.0
  %v843 = vmax.f32 %v831, 0.0
  %v844 = vmax.f32 %v834, 0.0
  %v845 = vld [vmem:[%s12] sm:$0x1]
  %v847 = vlaneseq
  %v848 = vshrl.u32 %v847, 7
  %v849 = vsub.s32 0, %v848
  %v850 = vrot.slane %v845, %v849
  %v852 = vmul.f32 %v837, %v850
  %v853 = vmul.f32 %v838, %v850
  %v854 = vmul.f32 %v839, %v850
  %v855 = vmul.f32 %v840, %v850
  %v856 = vmul.f32 %v841, %v850
  %v857 = vmul.f32 %v842, %v850
  %v858 = vmul.f32 %v843, %v850
  %v859 = vmul.f32 %v844, %v850
  %vm860 = vcmask 523264
  %v861 = vsel %vm860, %v852, 0.0
  %862 = vadd.xlane.f32.xlu0 %v861
  %v863 = vpop.xlane.xlu0 %862
  %v864 = vsel %vm860, %v853, 0.0
  %865 = vadd.xlane.f32.xlu0 %v864
  %v866 = vpop.xlane.xlu0 %865
  %v867 = vsel %vm860, %v854, 0.0
  %868 = vadd.xlane.f32.xlu0 %v867
  %v869 = vpop.xlane.xlu0 %868
  %v870 = vsel %vm860, %v855, 0.0
  %871 = vadd.xlane.f32.xlu0 %v870
  %v872 = vpop.xlane.xlu0 %871
  %v873 = vsel %vm860, %v856, 0.0
  %874 = vadd.xlane.f32.xlu0 %v873
  %v875 = vpop.xlane.xlu0 %874
  %v876 = vsel %vm860, %v857, 0.0
  %877 = vadd.xlane.f32.xlu0 %v876
  %v878 = vpop.xlane.xlu0 %877
  %v879 = vsel %vm860, %v858, 0.0
  %880 = vadd.xlane.f32.xlu0 %v879
  %v881 = vpop.xlane.xlu0 %880
  %v882 = vsel %vm860, %v859, 0.0
  %883 = vadd.xlane.f32.xlu0 %v882
  %v884 = vpop.xlane.xlu0 %883
  %v885 = vld [vmem:[#allocation7] sm:$0x1]
  %v887 = vlaneseq
  %v888 = vshrl.u32 %v887, 7
  %v889 = vsub.s32 0, %v888
  %v890 = vrot.slane %v885, %v889
  %v892 = vadd.f32 %v863, %v890
  %v893 = vadd.f32 %v866, %v890
  %v894 = vadd.f32 %v869, %v890
  %v895 = vadd.f32 %v872, %v890
  %v896 = vadd.f32 %v875, %v890
  %v897 = vadd.f32 %v878, %v890
  %v898 = vadd.f32 %v881, %v890
  %v899 = vadd.f32 %v884, %v890
  %vm900 = vcmask 7168
  %901 = vst.msk [vmem:[%s14] sm:$0xff] %vm900, %v892
  %902 = vst.msk [vmem:[%s14 + $0x8] sm:$0xff] %vm900, %v893
  %903 = vst.msk [vmem:[%s14 + $0x10] sm:$0xff] %vm900, %v894
  %904 = vst.msk [vmem:[%s14 + $0x18] sm:$0xff] %vm900, %v895
  %905 = vst.msk [vmem:[%s14 + $0x20] sm:$0xff] %vm900, %v896
  %906 = vst.msk [vmem:[%s14 + $0x28] sm:$0xff] %vm900, %v897
  %907 = vst.msk [vmem:[%s14 + $0x30] sm:$0xff] %vm900, %v898
  %908 = vst.msk [vmem:[%s14 + $0x38] sm:$0xff] %vm900, %v899
  // Predicated region
  $region57: #{custom_graph_sage_forward.3} parent=0 // pred_check
    _
  $region58: #{custom_graph_sage_forward.3} parent=0 // pred_check_branch
    %910 = sbr.rel (0) target = $region60
  $region59: #{custom_graph_sage_forward.3} parent=0 // pred_region
    _
  $region60: #{custom_graph_sage_forward.3} parent=0 // pred_fallthru
    _
  // Predicated region
  $region61: #{custom_graph_sage_forward.3} parent=0 // pred_check
    _
  $region62: #{custom_graph_sage_forward.3} parent=0 // pred_check_branch
    %912 = sbr.rel (0) target = $region64
  $region63: #{custom_graph_sage_forward.3} parent=0 // pred_region
    _
  $region64: #{custom_graph_sage_forward.3} parent=0 // pred_fallthru
    _

</llo_original>
